<compile_context>
chip_gen: v7x
topology: tpu7x:2x2x1
jax: 0.10.0
libtpu: 0.0.40
codegen_flags: <defaults>
</compile_context>

<pallas_src>
import math
from functools import partial

import jax
import jax.numpy as jnp
from jax.experimental import pallas as pl
from jax.experimental.pallas import tpu as pltpu


# ---------------------------------------------------------------------------
# Fused multi-layer CDGCN kernel: grid = (B,), layers unrolled in-kernel
# ---------------------------------------------------------------------------
def _fused_cdgcn_kernel(x_ref, wq_ref, wk_ref, wv_ref, mask_ref, out_ref,
                        *, num_heads, num_layers, compute_dtype):
    """One grid step == one batch element, all layers.

    x_ref    : (1, T, N, D)   input activation for this batch element
    w*_ref   : (L, D, D)      ALL layers' weights (VMEM resident)
    mask_ref : (H*N, D) f32   head block-diagonal mask (resident)
    out_ref  : (1, T, N, D)
    """
    _, T, N, D = x_ref.shape
    H = num_heads
    dh = D // H
    TN = T * N
    inv_sqrt_dh = 1.0 / math.sqrt(dh)
    cd = compute_dtype

    head_mask = mask_ref[...]                            # (H*N, D) f32, {0,1}

    # Activation stays live in VMEM across all layers for this batch element.
    act = x_ref[0].astype(jnp.float32)                   # (T, N, D)

    for layer in range(num_layers):                      # statically unrolled
        wq = wq_ref[layer]                               # (D, D) compute dtype
        wk = wk_ref[layer]
        wv = wv_ref[layer]

        # ---- temporal attention: tatt = sum_t act * softmax_T(act) ---------
        m = jnp.max(act, axis=0, keepdims=True)          # (1, N, D)
        e = jnp.exp(act - m)                             # (T, N, D)
        s = jnp.sum(e, axis=0)                           # (N, D)
        num = jnp.sum(act * e, axis=0)                   # (N, D)
        # approx=False keeps the 1e-4 f32 tolerance; approx=True (EUP) is a
        # further option once validated against the required accuracy.
        tatt = num * pl.reciprocal(s, approx=False)      # (N, D) f32

        # ---- projections (Q for all T at once, K/V once per batch elem) ----
        x2d = act.reshape(TN, D)
        q = jnp.dot(x2d.astype(cd), wq,
                    preferred_element_type=jnp.float32)              # (TN, D)
        # 1/sqrt(d_head) hoisted onto K: one (N,D) multiply per layer.
        k = jnp.dot(tatt.astype(cd), wk,
                    preferred_element_type=jnp.float32) * inv_sqrt_dh  # (N, D)
        v = jnp.dot(tatt.astype(cd), wv,
                    preferred_element_type=jnp.float32)               # (N, D)

        # ---- multi-head graph attention via head-block-diagonal matmuls ----
        # k_bd[d, h*N+n] = k[n, d] if d // dh == h else 0   -> (D, H*N)
        # v_bd[h*N+n, d] = v[n, d] if d // dh == h else 0   -> (H*N, D)
        k_bd = (jnp.tile(k, (H, 1)) * head_mask).T        # (D, H*N)
        v_bd = jnp.tile(v, (H, 1)) * head_mask            # (H*N, D)

        scores = jnp.dot(q.astype(cd), k_bd.astype(cd),
                         preferred_element_type=jnp.float32)   # (TN, H*N)
        scores = jnp.maximum(scores, 0.0)                      # relu(A)
        ctx = jnp.dot(scores.astype(cd), v_bd.astype(cd),
                      preferred_element_type=jnp.float32)      # (TN, D)

        # (relu(A) + I_N) @ V  ==  relu(A) @ V + V
        act = ctx.reshape(T, N, D) + v[None, :, :]

    # Single dense store, only once per batch element.
    out_ref[0] = act.astype(out_ref.dtype)


def multilayer_cdgcn(x, layer_weights, num_heads, *,
                     compute_dtype=jnp.float32,
                     vmem_limit_bytes=32 * 1024 * 1024):
    """x: (B, T, N, D); layer_weights: list of (Wq, Wk, Wv), each (D, D)."""
    B, T, N, D = x.shape
    L = len(layer_weights)
    H = num_heads
    assert D % H == 0, "d_model must be divisible by num_heads"
    dh = D // H

    # Narrow only the matmul operands (weights here, activations in-kernel).
    wq_all = jnp.stack([w[0] for w in layer_weights]).astype(compute_dtype)
    wk_all = jnp.stack([w[1] for w in layer_weights]).astype(compute_dtype)
    wv_all = jnp.stack([w[2] for w in layer_weights]).astype(compute_dtype)

    # Head block-diagonal selector mask (shape-only constant, built host-side
    # to avoid in-kernel integer-division iota math).
    head_mask = (
        (jnp.arange(H * N, dtype=jnp.int32)[:, None] // N)
        == (jnp.arange(D, dtype=jnp.int32)[None, :] // dh)
    ).astype(jnp.float32)                                  # (H*N, D)

    kernel = partial(_fused_cdgcn_kernel, num_heads=H, num_layers=L,
                     compute_dtype=compute_dtype)

    # Advisory cost estimate for XLA's scheduler.
    flops = 2 * B * L * (T * N * D * D          # Q projection
                         + 2 * N * D * D        # K, V projections
                         + T * N * (H * N) * D  # scores
                         + T * N * D * (H * N))  # context
    transcendentals = B * L * T * N * D          # exp in temporal attention
    bytes_accessed = (2 * B * T * N * D * x.dtype.itemsize
                      + 3 * L * D * D * jnp.dtype(compute_dtype).itemsize
                      + H * N * D * 4)

    return pl.pallas_call(
        kernel,
        out_shape=jax.ShapeDtypeStruct((B, T, N, D), x.dtype),
        grid=(B,),
        in_specs=[
            pl.BlockSpec((1, T, N, D), lambda b: (b, 0, 0, 0)),  # x[b]
            pl.BlockSpec((L, D, D), lambda b: (0, 0, 0)),        # all Wq (resident)
            pl.BlockSpec((L, D, D), lambda b: (0, 0, 0)),        # all Wk (resident)
            pl.BlockSpec((L, D, D), lambda b: (0, 0, 0)),        # all Wv (resident)
            pl.BlockSpec((H * N, D), lambda b: (0, 0)),          # head mask (resident)
        ],
        out_specs=pl.BlockSpec((1, T, N, D), lambda b: (b, 0, 0, 0)),
        compiler_params=pltpu.CompilerParams(
            dimension_semantics=("parallel",),
            vmem_limit_bytes=vmem_limit_bytes),
        cost_estimate=pl.CostEstimate(
            flops=flops, transcendentals=transcendentals,
            bytes_accessed=bytes_accessed),
    )(x, wq_all, wk_all, wv_all, head_mask)


# ---------------------------------------------------------------------------
# Pure-JAX reference (mirrors the PyTorch forward exactly)
# ---------------------------------------------------------------------------
def _ref_layer(x, wq, wk, wv, num_heads):
    B, T, N, D = x.shape
    dh = D // num_heads
    soft = jax.nn.softmax(x, axis=1)
    tatt = jnp.sum(x * soft, axis=1)                       # (B, N, D)
    tatt_rep = jnp.broadcast_to(tatt[:, None], (B, T, N, D))
    q = (x @ wq).reshape(B, T, N, num_heads, dh)
    k = (tatt_rep @ wk).reshape(B, T, N, num_heads, dh)
    v = (tatt_rep @ wv).reshape(B, T, N, num_heads, dh)
    a = jnp.einsum("btnhd,btmhd->bthnm", q, k) / math.sqrt(dh)
    a = jnp.maximum(a, 0.0) + jnp.eye(N, dtype=x.dtype)
    out = jnp.einsum("bthnm,btmhd->btnhd", a, v)
    return out.reshape(B, T, N, D)


def _ref_multilayer(x, layer_weights, num_heads):
    out = x
    for (wq, wk, wv) in layer_weights:
        out = _ref_layer(out, wq, wk, wv, num_heads)
    return out


# ---------------------------------------------------------------------------
if __name__ == "__main__":
    B, T, N, D = 2, 4, 8, 32
    num_heads = 4
    num_layers = 2

    key = jax.random.PRNGKey(0)
    kx, kw = jax.random.split(key)
    x = jax.random.normal(kx, (B, T, N, D), dtype=jnp.float32)

    # Deterministic per-layer weight init (uniform(-1/sqrt(D), 1/sqrt(D)),
    # like nn.Linear's default).
    bound = 1.0 / math.sqrt(D)
    layer_weights = []
    wkeys = jax.random.split(kw, num_layers * 3)
    for i in range(num_layers):
        wq = jax.random.uniform(wkeys[3 * i + 0], (D, D), jnp.float32, -bound, bound)
        wk_ = jax.random.uniform(wkeys[3 * i + 1], (D, D), jnp.float32, -bound, bound)
        wv = jax.random.uniform(wkeys[3 * i + 2], (D, D), jnp.float32, -bound, bound)
        layer_weights.append((wq, wk_, wv))

    ref = _ref_multilayer(x, layer_weights, num_heads)

    # f32 matmul operands: tight tolerance against the f32 reference.
    out = multilayer_cdgcn(x, layer_weights, num_heads)
    out = jax.block_until_ready(out)
    assert out.shape == (B, T, N, D)
    assert jnp.allclose(out, ref, atol=1e-4, rtol=1e-4), (
        f"f32 max abs diff {jnp.max(jnp.abs(out - ref))}")

    # bf16 matmul operands (v6e/v7x MXU path): f32 accumulation, loose tolerance.
    out_bf16 = multilayer_cdgcn(x, layer_weights, num_heads,
                                compute_dtype=jnp.bfloat16)
    out_bf16 = jax.block_until_ready(out_bf16)
    assert jnp.allclose(out_bf16, ref, atol=1e-1, rtol=1e-1), (
        f"bf16 max abs diff {jnp.max(jnp.abs(out_bf16 - ref))}")

    print("KERNEL_OK")
</pallas_src>

<mosaic_0001>
module attributes {stable_mosaic.version = 11 : i64} {
  func.func @_fused_cdgcn_kernel(%arg0: i32, %arg1: memref<1x4x8x32xf32, #tpu.memory_space<vmem>>, %arg2: memref<2x32x32xf32, #tpu.memory_space<vmem>>, %arg3: memref<2x32x32xf32, #tpu.memory_space<vmem>>, %arg4: memref<2x32x32xf32, #tpu.memory_space<vmem>>, %arg5: memref<32x32xf32, #tpu.memory_space<vmem>>, %arg6: memref<1x4x8x32xf32, #tpu.memory_space<vmem>>) attributes {dimension_semantics = [#tpu.dimension_semantics<parallel>], iteration_bounds = array<i64: 2>, scalar_prefetch = 0 : i64, scratch_operands = 0 : i64, tpu.core_type = #tpu.core_type<tc>, window_params = [{transform_indices = @transform_0, window_bounds = array<i64: 1, 4, 8, 32>}, {pipeline_mode = #tpu.pipeline_mode<synchronous>, transform_indices = @transform_1, window_bounds = array<i64: 2, 32, 32>}, {pipeline_mode = #tpu.pipeline_mode<synchronous>, transform_indices = @transform_2, window_bounds = array<i64: 2, 32, 32>}, {pipeline_mode = #tpu.pipeline_mode<synchronous>, transform_indices = @transform_3, window_bounds = array<i64: 2, 32, 32>}, {pipeline_mode = #tpu.pipeline_mode<synchronous>, transform_indices = @transform_4, window_bounds = array<i64: 32, 32>}, {transform_indices = @transform_5, window_bounds = array<i64: 1, 4, 8, 32>}]} {
    %c0 = arith.constant 0 : index
    %c0_0 = arith.constant 0 : index
    %0 = vector.load %arg5[%c0, %c0_0] : memref<32x32xf32, #tpu.memory_space<vmem>>, vector<32x32xf32>
    %c0_1 = arith.constant 0 : index
    %c0_2 = arith.constant 0 : index
    %c0_3 = arith.constant 0 : index
    %c0_4 = arith.constant 0 : index
    %1 = vector.load %arg1[%c0_1, %c0_2, %c0_3, %c0_4] : memref<1x4x8x32xf32, #tpu.memory_space<vmem>>, vector<1x4x8x32xf32>
    %2 = vector.shape_cast %1 : vector<1x4x8x32xf32> to vector<4x8x32xf32>
    %c0_5 = arith.constant 0 : index
    %c0_6 = arith.constant 0 : index
    %c0_7 = arith.constant 0 : index
    %3 = vector.load %arg2[%c0_5, %c0_6, %c0_7] : memref<2x32x32xf32, #tpu.memory_space<vmem>>, vector<1x32x32xf32>
    %4 = vector.shape_cast %3 : vector<1x32x32xf32> to vector<32x32xf32>
    %c0_8 = arith.constant 0 : index
    %c0_9 = arith.constant 0 : index
    %c0_10 = arith.constant 0 : index
    %5 = vector.load %arg3[%c0_8, %c0_9, %c0_10] : memref<2x32x32xf32, #tpu.memory_space<vmem>>, vector<1x32x32xf32>
    %6 = vector.shape_cast %5 : vector<1x32x32xf32> to vector<32x32xf32>
    %c0_11 = arith.constant 0 : index
    %c0_12 = arith.constant 0 : index
    %c0_13 = arith.constant 0 : index
    %7 = vector.load %arg4[%c0_11, %c0_12, %c0_13] : memref<2x32x32xf32, #tpu.memory_space<vmem>>, vector<1x32x32xf32>
    %8 = vector.shape_cast %7 : vector<1x32x32xf32> to vector<32x32xf32>
    %cst = arith.constant dense<0xFF800000> : vector<8x32xf32>
    %9 = vector.multi_reduction <maximumf>, %2, %cst [0] : vector<4x8x32xf32> to vector<8x32xf32>
    %10 = vector.shape_cast %9 : vector<8x32xf32> to vector<1x8x32xf32>
    %11 = vector.broadcast %10 : vector<1x8x32xf32> to vector<4x8x32xf32>
    %12 = arith.subf %2, %11 : vector<4x8x32xf32>
    %13 = math.exp %12 : vector<4x8x32xf32>
    %cst_14 = arith.constant dense<0.000000e+00> : vector<8x32xf32>
    %14 = vector.multi_reduction <add>, %13, %cst_14 [0] : vector<4x8x32xf32> to vector<8x32xf32>
    %15 = arith.mulf %2, %13 : vector<4x8x32xf32>
    %cst_15 = arith.constant dense<0.000000e+00> : vector<8x32xf32>
    %16 = vector.multi_reduction <add>, %15, %cst_15 [0] : vector<4x8x32xf32> to vector<8x32xf32>
    %17 = tpu.reciprocal %14 : vector<8x32xf32> -> vector<8x32xf32>
    %18 = arith.mulf %16, %17 : vector<8x32xf32>
    %19 = vector.shape_cast %2 : vector<4x8x32xf32> to vector<32x32xf32>
    %cst_16 = arith.constant dense<0.000000e+00> : vector<32x32xf32>
    %20 = tpu.matmul %19, %4, %cst_16 {dimension_numbers = #tpu.dot_dimension_numbers<[1], [0], [0], [1], [0, 0, 1, 1], [], []>} : vector<32x32xf32>, vector<32x32xf32>, vector<32x32xf32> -> vector<32x32xf32>
    %cst_17 = arith.constant dense<0.000000e+00> : vector<8x32xf32>
    %21 = tpu.matmul %18, %6, %cst_17 {dimension_numbers = #tpu.dot_dimension_numbers<[1], [0], [0], [1], [0, 0, 1, 1], [], []>} : vector<8x32xf32>, vector<32x32xf32>, vector<8x32xf32> -> vector<8x32xf32>
    %cst_18 = arith.constant 0.353553385 : f32
    %22 = vector.broadcast %cst_18 : f32 to vector<8x32xf32>
    %23 = arith.mulf %21, %22 : vector<8x32xf32>
    %cst_19 = arith.constant dense<0.000000e+00> : vector<8x32xf32>
    %24 = tpu.matmul %18, %8, %cst_19 {dimension_numbers = #tpu.dot_dimension_numbers<[1], [0], [0], [1], [0, 0, 1, 1], [], []>} : vector<8x32xf32>, vector<32x32xf32>, vector<8x32xf32> -> vector<8x32xf32>
    %25 = tpu.concatenate %23, %23, %23, %23 in 0 : vector<8x32xf32>, vector<8x32xf32>, vector<8x32xf32>, vector<8x32xf32> -> vector<32x32xf32>
    %26 = arith.mulf %25, %0 : vector<32x32xf32>
    %27 = tpu.transpose %26, [1, 0] : vector<32x32xf32> -> vector<32x32xf32>
    %28 = tpu.concatenate %24, %24, %24, %24 in 0 : vector<8x32xf32>, vector<8x32xf32>, vector<8x32xf32>, vector<8x32xf32> -> vector<32x32xf32>
    %29 = arith.mulf %28, %0 : vector<32x32xf32>
    %cst_20 = arith.constant dense<0.000000e+00> : vector<32x32xf32>
    %30 = tpu.matmul %20, %27, %cst_20 {dimension_numbers = #tpu.dot_dimension_numbers<[1], [0], [0], [1], [0, 0, 1, 1], [], []>} : vector<32x32xf32>, vector<32x32xf32>, vector<32x32xf32> -> vector<32x32xf32>
    %cst_21 = arith.constant 0.000000e+00 : f32
    %31 = vector.broadcast %cst_21 : f32 to vector<32x32xf32>
    %32 = arith.maximumf %30, %31 : vector<32x32xf32>
    %cst_22 = arith.constant dense<0.000000e+00> : vector<32x32xf32>
    %33 = tpu.matmul %32, %29, %cst_22 {dimension_numbers = #tpu.dot_dimension_numbers<[1], [0], [0], [1], [0, 0, 1, 1], [], []>} : vector<32x32xf32>, vector<32x32xf32>, vector<32x32xf32> -> vector<32x32xf32>
    %34 = vector.shape_cast %33 : vector<32x32xf32> to vector<4x8x32xf32>
    %35 = vector.shape_cast %24 : vector<8x32xf32> to vector<1x8x32xf32>
    %36 = vector.broadcast %35 : vector<1x8x32xf32> to vector<4x8x32xf32>
    %37 = arith.addf %34, %36 : vector<4x8x32xf32>
    %c1 = arith.constant 1 : index
    %c0_23 = arith.constant 0 : index
    %c0_24 = arith.constant 0 : index
    %38 = vector.load %arg2[%c1, %c0_23, %c0_24] : memref<2x32x32xf32, #tpu.memory_space<vmem>>, vector<1x32x32xf32>
    %39 = vector.shape_cast %38 : vector<1x32x32xf32> to vector<32x32xf32>
    %c1_25 = arith.constant 1 : index
    %c0_26 = arith.constant 0 : index
    %c0_27 = arith.constant 0 : index
    %40 = vector.load %arg3[%c1_25, %c0_26, %c0_27] : memref<2x32x32xf32, #tpu.memory_space<vmem>>, vector<1x32x32xf32>
    %41 = vector.shape_cast %40 : vector<1x32x32xf32> to vector<32x32xf32>
    %c1_28 = arith.constant 1 : index
    %c0_29 = arith.constant 0 : index
    %c0_30 = arith.constant 0 : index
    %42 = vector.load %arg4[%c1_28, %c0_29, %c0_30] : memref<2x32x32xf32, #tpu.memory_space<vmem>>, vector<1x32x32xf32>
    %43 = vector.shape_cast %42 : vector<1x32x32xf32> to vector<32x32xf32>
    %cst_31 = arith.constant dense<0xFF800000> : vector<8x32xf32>
    %44 = vector.multi_reduction <maximumf>, %37, %cst_31 [0] : vector<4x8x32xf32> to vector<8x32xf32>
    %45 = vector.shape_cast %44 : vector<8x32xf32> to vector<1x8x32xf32>
    %46 = vector.broadcast %45 : vector<1x8x32xf32> to vector<4x8x32xf32>
    %47 = arith.subf %37, %46 : vector<4x8x32xf32>
    %48 = math.exp %47 : vector<4x8x32xf32>
    %cst_32 = arith.constant dense<0.000000e+00> : vector<8x32xf32>
    %49 = vector.multi_reduction <add>, %48, %cst_32 [0] : vector<4x8x32xf32> to vector<8x32xf32>
    %50 = arith.mulf %37, %48 : vector<4x8x32xf32>
    %cst_33 = arith.constant dense<0.000000e+00> : vector<8x32xf32>
    %51 = vector.multi_reduction <add>, %50, %cst_33 [0] : vector<4x8x32xf32> to vector<8x32xf32>
    %52 = tpu.reciprocal %49 : vector<8x32xf32> -> vector<8x32xf32>
    %53 = arith.mulf %51, %52 : vector<8x32xf32>
    %54 = vector.shape_cast %37 : vector<4x8x32xf32> to vector<32x32xf32>
    %cst_34 = arith.constant dense<0.000000e+00> : vector<32x32xf32>
    %55 = tpu.matmul %54, %39, %cst_34 {dimension_numbers = #tpu.dot_dimension_numbers<[1], [0], [0], [1], [0, 0, 1, 1], [], []>} : vector<32x32xf32>, vector<32x32xf32>, vector<32x32xf32> -> vector<32x32xf32>
    %cst_35 = arith.constant dense<0.000000e+00> : vector<8x32xf32>
    %56 = tpu.matmul %53, %41, %cst_35 {dimension_numbers = #tpu.dot_dimension_numbers<[1], [0], [0], [1], [0, 0, 1, 1], [], []>} : vector<8x32xf32>, vector<32x32xf32>, vector<8x32xf32> -> vector<8x32xf32>
    %cst_36 = arith.constant 0.353553385 : f32
    %57 = vector.broadcast %cst_36 : f32 to vector<8x32xf32>
    %58 = arith.mulf %56, %57 : vector<8x32xf32>
    %cst_37 = arith.constant dense<0.000000e+00> : vector<8x32xf32>
    %59 = tpu.matmul %53, %43, %cst_37 {dimension_numbers = #tpu.dot_dimension_numbers<[1], [0], [0], [1], [0, 0, 1, 1], [], []>} : vector<8x32xf32>, vector<32x32xf32>, vector<8x32xf32> -> vector<8x32xf32>
    %60 = tpu.concatenate %58, %58, %58, %58 in 0 : vector<8x32xf32>, vector<8x32xf32>, vector<8x32xf32>, vector<8x32xf32> -> vector<32x32xf32>
    %61 = arith.mulf %60, %0 : vector<32x32xf32>
    %62 = tpu.transpose %61, [1, 0] : vector<32x32xf32> -> vector<32x32xf32>
    %63 = tpu.concatenate %59, %59, %59, %59 in 0 : vector<8x32xf32>, vector<8x32xf32>, vector<8x32xf32>, vector<8x32xf32> -> vector<32x32xf32>
    %64 = arith.mulf %63, %0 : vector<32x32xf32>
    %cst_38 = arith.constant dense<0.000000e+00> : vector<32x32xf32>
    %65 = tpu.matmul %55, %62, %cst_38 {dimension_numbers = #tpu.dot_dimension_numbers<[1], [0], [0], [1], [0, 0, 1, 1], [], []>} : vector<32x32xf32>, vector<32x32xf32>, vector<32x32xf32> -> vector<32x32xf32>
    %cst_39 = arith.constant 0.000000e+00 : f32
    %66 = vector.broadcast %cst_39 : f32 to vector<32x32xf32>
    %67 = arith.maximumf %65, %66 : vector<32x32xf32>
    %cst_40 = arith.constant dense<0.000000e+00> : vector<32x32xf32>
    %68 = tpu.matmul %67, %64, %cst_40 {dimension_numbers = #tpu.dot_dimension_numbers<[1], [0], [0], [1], [0, 0, 1, 1], [], []>} : vector<32x32xf32>, vector<32x32xf32>, vector<32x32xf32> -> vector<32x32xf32>
    %69 = vector.shape_cast %68 : vector<32x32xf32> to vector<4x8x32xf32>
    %70 = vector.shape_cast %59 : vector<8x32xf32> to vector<1x8x32xf32>
    %71 = vector.broadcast %70 : vector<1x8x32xf32> to vector<4x8x32xf32>
    %72 = arith.addf %69, %71 : vector<4x8x32xf32>
    %c0_41 = arith.constant 0 : index
    %c0_42 = arith.constant 0 : index
    %c0_43 = arith.constant 0 : index
    %c0_44 = arith.constant 0 : index
    %73 = vector.load %arg6[%c0_41, %c0_42, %c0_43, %c0_44] : memref<1x4x8x32xf32, #tpu.memory_space<vmem>>, vector<1x4x8x32xf32>
    %74 = vector.shape_cast %73 : vector<1x4x8x32xf32> to vector<4x8x32xf32>
    %75 = vector.shape_cast %72 : vector<4x8x32xf32> to vector<1x4x8x32xf32>
    tpu.vector_store %arg6[%c0_41, %c0_42, %c0_43, %c0_44], %75 {strides = array<i32>} : memref<1x4x8x32xf32, #tpu.memory_space<vmem>>, vector<1x4x8x32xf32>,
    return
  }
  func.func @transform_0(%arg0: i32) -> (i32, i32, i32, i32) {
    %c0_i32 = arith.constant 0 : i32
    %c0_i32_0 = arith.constant 0 : i32
    %c0_i32_1 = arith.constant 0 : i32
    %c0_i32_2 = arith.constant 0 : i32
    return %arg0, %c0_i32, %c0_i32_0, %c0_i32_1 : i32, i32, i32, i32
  }
  func.func @transform_1(%arg0: i32) -> (i32, i32, i32) {
    %c0_i32 = arith.constant 0 : i32
    %c0_i32_0 = arith.constant 0 : i32
    %c0_i32_1 = arith.constant 0 : i32
    %c0_i32_2 = arith.constant 0 : i32
    return %c0_i32, %c0_i32_0, %c0_i32_1 : i32, i32, i32
  }
  func.func @transform_2(%arg0: i32) -> (i32, i32, i32) {
    %c0_i32 = arith.constant 0 : i32
    %c0_i32_0 = arith.constant 0 : i32
    %c0_i32_1 = arith.constant 0 : i32
    %c0_i32_2 = arith.constant 0 : i32
    return %c0_i32, %c0_i32_0, %c0_i32_1 : i32, i32, i32
  }
  func.func @transform_3(%arg0: i32) -> (i32, i32, i32) {
    %c0_i32 = arith.constant 0 : i32
    %c0_i32_0 = arith.constant 0 : i32
    %c0_i32_1 = arith.constant 0 : i32
    %c0_i32_2 = arith.constant 0 : i32
    return %c0_i32, %c0_i32_0, %c0_i32_1 : i32, i32, i32
  }
  func.func @transform_4(%arg0: i32) -> (i32, i32) {
    %c0_i32 = arith.constant 0 : i32
    %c0_i32_0 = arith.constant 0 : i32
    %c0_i32_1 = arith.constant 0 : i32
    return %c0_i32, %c0_i32_0 : i32, i32
  }
  func.func @transform_5(%arg0: i32) -> (i32, i32, i32, i32) {
    %c0_i32 = arith.constant 0 : i32
    %c0_i32_0 = arith.constant 0 : i32
    %c0_i32_1 = arith.constant 0 : i32
    %c0_i32_2 = arith.constant 0 : i32
    return %arg0, %c0_i32, %c0_i32_0, %c0_i32_1 : i32, i32, i32, i32
  }
}

</mosaic_0001>

<llo_original>
// kernel: tpu_custom_call.1
$region0: #{tpu_custom_call.1}
  #allocation0 [shape = 'u32[]', space=smem, size = 0x4, offset = 0x4, fixed_abs, tag = 'smem constant byte address 0x4 - core index']
  #allocation1 [shape = 'u32[144,128]{1,0:T(1,128)}', space=vmem, size = 0x12000, scoped, tag = 'internal scratch']
  %s0 = inlined_call_operand.hbm [shape: f32[2,4,8,32], index: 0, kind: input, shape index: {}]
  %s1 = inlined_call_operand.hbm [shape: f32[2,32,32], index: 1, kind: input, shape index: {}]
  %s2 = inlined_call_operand.hbm [shape: f32[2,32,32], index: 2, kind: input, shape index: {}]
  %s3 = inlined_call_operand.hbm [shape: f32[2,32,32], index: 3, kind: input, shape index: {}]
  %s4 = inlined_call_operand.hbm [shape: f32[32,32], index: 4, kind: input, shape index: {}]
  %s5 = inlined_call_operand.hbm [shape: f32[2,4,8,32], index: 5, kind: output, shape index: {}]
  %s6 = sld [smem:[#allocation0]]
  $region73: #{tpu_custom_call.1} parent=0
    _
  %s8 = ssub.s32 1, %s6
  %s9 = scalar_select 0, %s8, %s6
  $region1: #{tpu_custom_call.1} parent=0
    #allocation2 [shape = 'u8[32768]{0}', space=vmem, size = 0x8000, scoped, tag = 'input window, operand 0']
    #allocation3 [shape = 's32[2]{0}', space=sflag, size = 0x8, scoped, tag = 'scoped memory for tpu_custom_call.1']
    #allocation4 [shape = 's32[2]{0}', space=sflag, size = 0x8, scoped, tag = 'scoped memory for tpu_custom_call.1']
    #allocation5 [shape = 'u8[32768]{0}', space=vmem, size = 0x8000, scoped, tag = 'input window, operand 1, single buffered']
    #allocation6 [shape = 's32[1]{0}', space=sflag, size = 0x4, scoped, tag = 'scoped memory for tpu_custom_call.1']
    #allocation7 [shape = 'u8[32768]{0}', space=vmem, size = 0x8000, scoped, tag = 'input window, operand 2, single buffered']
    #allocation8 [shape = 'u8[32768]{0}', space=vmem, size = 0x8000, scoped, tag = 'input window, operand 3, single buffered']
    #allocation9 [shape = 's32[1]{0}', space=sflag, size = 0x4, scoped, tag = 'scoped memory for tpu_custom_call.1']
    #allocation10 [shape = 'u8[16384]{0}', space=vmem, size = 0x4000, scoped, tag = 'input window, operand 4, single buffered']
    #allocation11 [shape = 'u8[32768]{0}', space=vmem, size = 0x8000, scoped, tag = 'output window, operand 0']
    %10 = vsyncpa [#allocation3], 0
    %s11 = scalar_lea.sflag [#allocation3], 1
    %12 = vsyncpa %s11, 0
    %13 = vsyncpa [#allocation6], 0
    %14 = vsyncpa [#allocation9], 0
    %15 = vsyncpa [#allocation4], 0
    %s16 = scalar_lea.sflag [#allocation4], 1
    %17 = vsyncpa %s16, 0
    loop: start=0, step=1, limit=4
    $region2: #{tpu_custom_call.1} parent=1 // loop_pre_header
      _
    $region3: #{tpu_custom_call.1} parent=1 // loop_header
      %s19 = sphi 0, %s23
      %p20 = scmp.ge.s32.totalorder %s19, 4
      %s29 = sphi 0, %s31
      %s32 = sphi 0, %s29
      %s33 = sphi 0, %s32
      %s49 = sphi 0, %s33
      %s53 = sphi 0, %s53
      %s55 = sphi 0, %s53
      %s56 = sphi 0, %s55
      %s70 = sphi 0, %s56
      %s74 = sphi 0, %s74
      %s76 = sphi 0, %s74
      %s77 = sphi 0, %s76
      %s91 = sphi 0, %s77
      %s95 = sphi 0, %s95
      %s97 = sphi 0, %s95
      %s98 = sphi 0, %s97
      %s112 = sphi 0, %s98
      %s116 = sphi 0, %s116
      %s118 = sphi 0, %s116
      %s119 = sphi 0, %s118
      %s133 = sphi 0, %s119
      %s139 = sphi 0, %s141
      %s142 = sphi 0, %s139
      %s143 = sphi 0, %s142
      %s159 = sphi 0, %s143
    $region4: #{tpu_custom_call.1} parent=1 // loop_header_branch
      %22 = sbr.rel (%p20) target = $region8
    $region5: #{tpu_custom_call.1} parent=1 // loop_body
      %s24 = ssub.s32 %s19, 1
      %s25 = ssub.s32 %s19, 2
      %s26 = sadd.s32 %s19, 1
      %s27 = ssub.s32 %s19, %s26
      %p28 = scmp.eq.s32.totalorder %s27, 0
      %s30 = sadd.s32 %s29, 1
      %s31 = scalar_select %p28, %s29, %s30
      %p34 = pneg %p28
      %p35 = scmp.eq.s32.totalorder %s19, 1
      %p36 = por %p34, %p35
      %p37 = scmp.ne.s32.totalorder %s29, %s32
      %p38 = scmp.eq.s32.totalorder %s19, 0
      %p39 = por %p37, %p38
      %p40 = scmp.ne.s32.totalorder %s29, %s32
      %p41 = scmp.eq.s32.totalorder %s24, 1
      %p42 = por %p40, %p41
      %p43 = scmp.ne.s32.totalorder %s32, %s33
      %p44 = scmp.eq.s32.totalorder %s24, 0
      %p45 = por %p43, %p44
      %p46 = scmp.ne.s32.totalorder %s32, %s33
      %p47 = scmp.eq.s32.totalorder %s25, 1
      %p48 = por %p46, %p47
      %p50 = scmp.ne.s32.totalorder %s33, %s49
      %p51 = scmp.eq.s32.totalorder %s25, 0
      %p52 = por %p50, %p51
      %s54 = sadd.s32 %s53, 1
      %p57 = scmp.eq.s32.totalorder %s19, 1
      %p58 = scmp.ne.s32.totalorder %s53, %s55
      %p59 = scmp.eq.s32.totalorder %s19, 0
      %p60 = por %p58, %p59
      %p61 = scmp.ne.s32.totalorder %s53, %s55
      %p62 = scmp.eq.s32.totalorder %s24, 1
      %p63 = por %p61, %p62
      %p64 = scmp.ne.s32.totalorder %s55, %s56
      %p65 = scmp.eq.s32.totalorder %s24, 0
      %p66 = por %p64, %p65
      %p67 = scmp.ne.s32.totalorder %s55, %s56
      %p68 = scmp.eq.s32.totalorder %s25, 1
      %p69 = por %p67, %p68
      %p71 = scmp.ne.s32.totalorder %s56, %s70
      %p72 = scmp.eq.s32.totalorder %s25, 0
      %p73 = por %p71, %p72
      %s75 = sadd.s32 %s74, 1
      %p78 = scmp.eq.s32.totalorder %s19, 1
      %p79 = scmp.ne.s32.totalorder %s74, %s76
      %p80 = scmp.eq.s32.totalorder %s19, 0
      %p81 = por %p79, %p80
      %p82 = scmp.ne.s32.totalorder %s74, %s76
      %p83 = scmp.eq.s32.totalorder %s24, 1
      %p84 = por %p82, %p83
      %p85 = scmp.ne.s32.totalorder %s76, %s77
      %p86 = scmp.eq.s32.totalorder %s24, 0
      %p87 = por %p85, %p86
      %p88 = scmp.ne.s32.totalorder %s76, %s77
      %p89 = scmp.eq.s32.totalorder %s25, 1
      %p90 = por %p88, %p89
      %p92 = scmp.ne.s32.totalorder %s77, %s91
      %p93 = scmp.eq.s32.totalorder %s25, 0
      %p94 = por %p92, %p93
      %s96 = sadd.s32 %s95, 1
      %p99 = scmp.eq.s32.totalorder %s19, 1
      %p100 = scmp.ne.s32.totalorder %s95, %s97
      %p101 = scmp.eq.s32.totalorder %s19, 0
      %p102 = por %p100, %p101
      %p103 = scmp.ne.s32.totalorder %s95, %s97
      %p104 = scmp.eq.s32.totalorder %s24, 1
      %p105 = por %p103, %p104
      %p106 = scmp.ne.s32.totalorder %s97, %s98
      %p107 = scmp.eq.s32.totalorder %s24, 0
      %p108 = por %p106, %p107
      %p109 = scmp.ne.s32.totalorder %s97, %s98
      %p110 = scmp.eq.s32.totalorder %s25, 1
      %p111 = por %p109, %p110
      %p113 = scmp.ne.s32.totalorder %s98, %s112
      %p114 = scmp.eq.s32.totalorder %s25, 0
      %p115 = por %p113, %p114
      %s117 = sadd.s32 %s116, 1
      %p120 = scmp.eq.s32.totalorder %s19, 1
      %p121 = scmp.ne.s32.totalorder %s116, %s118
      %p122 = scmp.eq.s32.totalorder %s19, 0
      %p123 = por %p121, %p122
      %p124 = scmp.ne.s32.totalorder %s116, %s118
      %p125 = scmp.eq.s32.totalorder %s24, 1
      %p126 = por %p124, %p125
      %p127 = scmp.ne.s32.totalorder %s118, %s119
      %p128 = scmp.eq.s32.totalorder %s24, 0
      %p129 = por %p127, %p128
      %p130 = scmp.ne.s32.totalorder %s118, %s119
      %p131 = scmp.eq.s32.totalorder %s25, 1
      %p132 = por %p130, %p131
      %p134 = scmp.ne.s32.totalorder %s119, %s133
      %p135 = scmp.eq.s32.totalorder %s25, 0
      %p136 = por %p134, %p135
      %s137 = ssub.s32 %s19, %s26
      %p138 = scmp.eq.s32.totalorder %s137, 0
      %s140 = sadd.s32 %s139, 1
      %s141 = scalar_select %p138, %s139, %s140
      %p144 = pneg %p138
      %p145 = scmp.eq.s32.totalorder %s19, 1
      %p146 = por %p144, %p145
      %p147 = scmp.ne.s32.totalorder %s139, %s142
      %p148 = scmp.eq.s32.totalorder %s19, 0
      %p149 = por %p147, %p148
      %p150 = scmp.ne.s32.totalorder %s139, %s142
      %p151 = scmp.eq.s32.totalorder %s24, 1
      %p152 = por %p150, %p151
      %p153 = scmp.ne.s32.totalorder %s142, %s143
      %p154 = scmp.eq.s32.totalorder %s24, 0
      %p155 = por %p153, %p154
      %p156 = scmp.ne.s32.totalorder %s142, %s143
      %p157 = scmp.eq.s32.totalorder %s25, 1
      %p158 = por %p156, %p157
      %p160 = scmp.ne.s32.totalorder %s143, %s159
      %p161 = scmp.eq.s32.totalorder %s25, 0
      %p162 = por %p160, %p161
      %p163 = scmp.le.s32.totalorder 1, %s19
      %p164 = scmp.lt.s32.totalorder %s19, 3
      %p165 = pnand %p163, %p164
      %p166 = pneg %p165
      // Predicated region
      $region9: #{tpu_custom_call.1} parent=5 // pred_check
        _
      $region10: #{tpu_custom_call.1} parent=5 // pred_check_branch
        %168 = sbr.rel (%p165) target = $region12
      $region11: #{tpu_custom_call.1} parent=5 // pred_region
        %s169 = ssub.s32 %s19, 1
        // Predicated region
        $region13: #{tpu_custom_call.1} parent=11 // pred_check
          %p170 = pneg %p66
        $region14: #{tpu_custom_call.1} parent=11 // pred_check_branch
          %172 = sbr.rel (%p170) target = $region16
        $region15: #{tpu_custom_call.1} parent=11 // pred_region
          %s174 = ssub.s32 1024, 1024
          %175 = vsyncadd [#allocation6], %s174
          %s176 = sshll.u32 [#allocation5], 4
          %s177 = int_to_ptr.vmem [resolvable:$true] %s176
          %182 = dma.hbm_to_vmem [thread:$0]  %s1, 1024, %s177, [#allocation6], 128, 128, 8
        $region16: #{tpu_custom_call.1} parent=11 // pred_fallthru
          _
        // Predicated region
        $region17: #{tpu_custom_call.1} parent=11 // pred_check
          %p183 = pneg %p87
        $region18: #{tpu_custom_call.1} parent=11 // pred_check_branch
          %185 = sbr.rel (%p183) target = $region20
        $region19: #{tpu_custom_call.1} parent=11 // pred_region
          %s187 = ssub.s32 1024, 1024
          %188 = vsyncadd [#allocation6], %s187
          %s189 = sshll.u32 [#allocation7], 4
          %s190 = int_to_ptr.vmem [resolvable:$true] %s189
          %195 = dma.hbm_to_vmem [thread:$0]  %s2, 1024, %s190, [#allocation6], 128, 128, 8
        $region20: #{tpu_custom_call.1} parent=11 // pred_fallthru
          _
        // Predicated region
        $region21: #{tpu_custom_call.1} parent=11 // pred_check
          %p196 = pneg %p108
        $region22: #{tpu_custom_call.1} parent=11 // pred_check_branch
          %198 = sbr.rel (%p196) target = $region24
        $region23: #{tpu_custom_call.1} parent=11 // pred_region
          %s200 = ssub.s32 1024, 1024
          %201 = vsyncadd [#allocation9], %s200
          %s202 = sshll.u32 [#allocation8], 4
          %s203 = int_to_ptr.vmem [resolvable:$true] %s202
          %208 = dma.hbm_to_vmem [thread:$0]  %s3, 1024, %s203, [#allocation9], 128, 128, 8
        $region24: #{tpu_custom_call.1} parent=11 // pred_fallthru
          _
        // Predicated region
        $region25: #{tpu_custom_call.1} parent=11 // pred_check
          %p209 = pneg %p129
        $region26: #{tpu_custom_call.1} parent=11 // pred_check_branch
          %211 = sbr.rel (%p209) target = $region28
        $region27: #{tpu_custom_call.1} parent=11 // pred_region
          %s213 = ssub.s32 512, 512
          %214 = vsyncadd [#allocation9], %s213
          %s215 = sshll.u32 [#allocation10], 4
          %s216 = int_to_ptr.vmem [resolvable:$true] %s215
          %221 = dma.hbm_to_vmem [thread:$0]  %s4, 512, %s216, [#allocation9], 128, 128, 8
        $region28: #{tpu_custom_call.1} parent=11 // pred_fallthru
          _
      $region12: #{tpu_custom_call.1} parent=5 // pred_fallthru
        _
      %p222 = scmp.lt.s32.totalorder %s19, 2
      // Predicated region
      $region29: #{tpu_custom_call.1} parent=5 // pred_check
        %p223 = pneg %p222
      $region30: #{tpu_custom_call.1} parent=5 // pred_check_branch
        %225 = sbr.rel (%p223) target = $region32
      $region31: #{tpu_custom_call.1} parent=5 // pred_region
        // Predicated region
        $region33: #{tpu_custom_call.1} parent=31 // pred_check
          %p226 = pneg %p39
        $region34: #{tpu_custom_call.1} parent=31 // pred_check_branch
          %228 = sbr.rel (%p226) target = $region36
        $region35: #{tpu_custom_call.1} parent=31 // pred_region
          %s229 = sand.u32 %s29, 1
          %s230 = scalar_lea.sflag [#allocation3], %s229
          %s231 = sand.u32 %s29, 1
          %s232 = smul.addr %s231, 32
          %s233 = scalar_lea.vmem [#allocation2], %s232
          %s235 = ssub.s32 512, 512
          %236 = vsyncadd %s230, %s235
          %s237 = smul.addr %s19, 4
          %s238 = smul.addr %s237, 128
          %s239 = scalar_lea.hbm %s0, %s238
          %s240 = sshll.u32 %s233, 4
          %s241 = int_to_ptr.vmem [resolvable:$true] %s240
          %246 = dma.hbm_to_vmem [thread:$0]  %s239, 512, %s241, %s230, 128, 128, 8
        $region36: #{tpu_custom_call.1} parent=31 // pred_fallthru
          _
      $region32: #{tpu_custom_call.1} parent=5 // pred_fallthru
        _
      %p247 = scmp.le.s32.totalorder 1, %s19
      %p248 = scmp.lt.s32.totalorder %s19, 3
      %p249 = pnand %p247, %p248
      %p250 = pneg %p249
      // Predicated region
      $region37: #{tpu_custom_call.1} parent=5 // pred_check
        _
      $region38: #{tpu_custom_call.1} parent=5 // pred_check_branch
        %252 = sbr.rel (%p249) target = $region40
      $region39: #{tpu_custom_call.1} parent=5 // pred_region
        %s253 = ssub.s32 %s19, 1
        %s254 = sand.u32 %s32, 1
        %s255 = scalar_lea.sflag [#allocation3], %s254
        %s256 = sand.u32 %s32, 1
        %s257 = smul.addr %s256, 32
        %s258 = scalar_lea.vmem [#allocation2], %s257
        // Predicated region
        $region41: #{tpu_custom_call.1} parent=39 // pred_check
          %p259 = pneg %p45
        $region42: #{tpu_custom_call.1} parent=39 // pred_check_branch
          %261 = sbr.rel (%p259) target = $region44
        $region43: #{tpu_custom_call.1} parent=39 // pred_region
          %262 = dma.done %s255, 512
        $region44: #{tpu_custom_call.1} parent=39 // pred_fallthru
          _
        // Predicated region
        $region45: #{tpu_custom_call.1} parent=39 // pred_check
          %p263 = pneg %p66
        $region46: #{tpu_custom_call.1} parent=39 // pred_check_branch
          %265 = sbr.rel (%p263) target = $region48
        $region47: #{tpu_custom_call.1} parent=39 // pred_region
          %266 = dma.done [#allocation6], 1024
        $region48: #{tpu_custom_call.1} parent=39 // pred_fallthru
          _
        // Predicated region
        $region49: #{tpu_custom_call.1} parent=39 // pred_check
          %p267 = pneg %p87
        $region50: #{tpu_custom_call.1} parent=39 // pred_check_branch
          %269 = sbr.rel (%p267) target = $region52
        $region51: #{tpu_custom_call.1} parent=39 // pred_region
          %270 = dma.done [#allocation6], 1024
        $region52: #{tpu_custom_call.1} parent=39 // pred_fallthru
          _
        // Predicated region
        $region53: #{tpu_custom_call.1} parent=39 // pred_check
          %p271 = pneg %p108
        $region54: #{tpu_custom_call.1} parent=39 // pred_check_branch
          %273 = sbr.rel (%p271) target = $region56
        $region55: #{tpu_custom_call.1} parent=39 // pred_region
          %274 = dma.done [#allocation9], 1024
        $region56: #{tpu_custom_call.1} parent=39 // pred_fallthru
          _
        // Predicated region
        $region57: #{tpu_custom_call.1} parent=39 // pred_check
          %p275 = pneg %p129
        $region58: #{tpu_custom_call.1} parent=39 // pred_check_branch
          %277 = sbr.rel (%p275) target = $region60
        $region59: #{tpu_custom_call.1} parent=39 // pred_region
          %278 = dma.done [#allocation9], 512
        $region60: #{tpu_custom_call.1} parent=39 // pred_fallthru
          _
        %s279 = sand.u32 %s32, 1
        %s280 = scalar_lea.sflag [#allocation3], %s279
        %s281 = sand.u32 %s32, 1
        %s282 = smul.addr %s281, 32
        %s283 = scalar_lea.vmem [#allocation2], %s282
        %p284 = pneg %p45
        %p285 = pneg %p42
        %p286 = pneg %p66
        %p287 = pneg %p63
        %p288 = pneg %p87
        %p289 = pneg %p84
        %p290 = pneg %p108
        %p291 = pneg %p105
        %p292 = pneg %p129
        %p293 = pneg %p126
        %p294 = pneg %p155
        %p295 = pneg %p152
        %s296 = sand.u32 %s142, 1
        %s297 = scalar_lea.sflag [#allocation4], %s296
        %s298 = sand.u32 %s142, 1
        %s299 = smul.addr %s298, 32
        %s300 = scalar_lea.vmem [#allocation11], %s299
        %v301 = vld [vmem:[#allocation10] sm:$0xff]
        %v302 = vld [vmem:[#allocation10 + $0x8] sm:$0xff]
        %v303 = vld [vmem:[#allocation10 + $0x10] sm:$0xff]
        %v304 = vld [vmem:[#allocation10 + $0x18] sm:$0xff]
        %v305 = vld [vmem:[%s258] sm:$0xff]
        %v306 = vld [vmem:[%s258 + $0x8] sm:$0xff]
        %v307 = vld [vmem:[%s258 + $0x10] sm:$0xff]
        %v308 = vld [vmem:[%s258 + $0x18] sm:$0xff]
        %v309 = vld [vmem:[#allocation5] sm:$0xff]
        %v310 = vld [vmem:[#allocation5 + $0x8] sm:$0xff]
        %v311 = vld [vmem:[#allocation5 + $0x10] sm:$0xff]
        %v312 = vld [vmem:[#allocation5 + $0x18] sm:$0xff]
        %v313 = vld [vmem:[#allocation7] sm:$0xff]
        %v314 = vld [vmem:[#allocation7 + $0x8] sm:$0xff]
        %v315 = vld [vmem:[#allocation7 + $0x10] sm:$0xff]
        %v316 = vld [vmem:[#allocation7 + $0x18] sm:$0xff]
        %v317 = vld [vmem:[#allocation8] sm:$0xff]
        %v318 = vld [vmem:[#allocation8 + $0x8] sm:$0xff]
        %v319 = vld [vmem:[#allocation8 + $0x10] sm:$0xff]
        %v320 = vld [vmem:[#allocation8 + $0x18] sm:$0xff]
        %vm321 = vcmask 261120
        %v322 = vsel %vm321, %v305, -inf
        %v323 = vsel %vm321, %v306, -inf
        %v324 = vsel %vm321, %v307, -inf
        %v325 = vsel %vm321, %v308, -inf
        %v326 = vmax.f32 %v322, %v323
        %v327 = vmax.f32 %v324, %v325
        %v328 = vmax.f32 %v326, %v327
        %v329 = vsub.f32 %v305, %v328
        %v330 = vsub.f32 %v306, %v328
        %v331 = vsub.f32 %v307, %v328
        %v332 = vsub.f32 %v308, %v328
        %v333 = vmul.f32 %v329, 1.442695
        %v334 = vpow.pop %v333
        %v335 = vmul.f32 %v330, 1.442695
        %v336 = vpow.pop %v335
        %v337 = vmul.f32 %v331, 1.442695
        %v338 = vpow.pop %v337
        %v339 = vmul.f32 %v332, 1.442695
        %v340 = vpow.pop %v339
        %v341 = vsel %vm321, %v334, 0.0
        %v342 = vsel %vm321, %v336, 0.0
        %v343 = vadd.f32 %v341, %v342
        %v344 = vsel %vm321, %v338, 0.0
        %v345 = vadd.f32 %v343, %v344
        %v346 = vsel %vm321, %v340, 0.0
        %v347 = vadd.f32 %v345, %v346
        %v348 = vmul.f32 %v305, %v334
        %v349 = vmul.f32 %v306, %v336
        %v350 = vmul.f32 %v307, %v338
        %v351 = vmul.f32 %v308, %v340
        %v352 = vsel %vm321, %v348, 0.0
        %v353 = vsel %vm321, %v349, 0.0
        %v354 = vadd.f32 %v352, %v353
        %v355 = vsel %vm321, %v350, 0.0
        %v356 = vadd.f32 %v354, %v355
        %v357 = vsel %vm321, %v351, 0.0
        %v358 = vadd.f32 %v356, %v357
        %v359 = vrcp.pop %v347
        %v360 = vmul.f32 %v358, %v359
        %v362 = vsel %vm321, %v305, 0
        %v365 = vsel %vm321, %v306, 0
        %v368 = vsel %vm321, %v307, 0
        %v371 = vsel %vm321, %v308, 0
        %373 = vmatprep.subr.mxu0 0.0
        %374 = vmatpush1.msra.mxu0 %v309
        %375 = vmatprep.subr.mxu0 0.0
        %376 = vmatpush1.msra.mxu0 %v310
        %377 = vmatprep.subr.mxu0 0.0
        %378 = vmatpush1.msra.mxu0 %v311
        %379 = vmatprep.subr.mxu0 0.0
        %380 = vmatpush1.msra.mxu0 %v312
        %381 = vmatprep.subr.mxu0 0.0
        %382 = vmatpush1.msra.mxu0 0.0
        %383 = vmatprep.subr.mxu0 0.0
        %384 = vmatpush1.msra.mxu0 0.0
        %385 = vmatprep.subr.mxu0 0.0
        %386 = vmatpush1.msra.mxu0 0.0
        %387 = vmatprep.subr.mxu0 0.0
        %388 = vmatpush1.msra.mxu0 0.0
        %389 = vmatprep.subr.mxu0 0.0
        %390 = vmatpush1.msra.mxu0 0.0
        %391 = vmatprep.subr.mxu0 0.0
        %392 = vmatpush1.msra.mxu0 0.0
        %393 = vmatprep.subr.mxu0 0.0
        %394 = vmatpush1.msra.mxu0 0.0
        %395 = vmatprep.subr.mxu0 0.0
        %396 = vmatpush1.msra.mxu0 0.0
        %397 = vmatprep.subr.mxu0 0.0
        %398 = vmatpush1.msra.mxu0 0.0
        %399 = vmatprep.subr.mxu0 0.0
        %400 = vmatpush1.msra.mxu0 0.0
        %401 = vmatprep.subr.mxu0 0.0
        %402 = vmatpush1.msra.mxu0 0.0
        %403 = vmatprep.subr.mxu0 0.0
        %404 = vmatpush1.msra.mxu0 0.0
        %405 = vmatprep.subr.mxu0 0.0
        %406 = vmatpush1.msra.mxu0 0.0
        %407 = vmatprep.subr.mxu0 0.0
        %408 = vmatpush1.msra.mxu0 0.0
        %409 = vmatprep.subr.mxu0 0.0
        %410 = vmatpush1.msra.mxu0 0.0
        %411 = vmatprep.subr.mxu0 0.0
        %412 = vmatpush1.msra.mxu0 0.0
        %413 = vmatprep.subr.mxu0 0.0
        %414 = vmatpush1.msra.mxu0 0.0
        %415 = vmatprep.subr.mxu0 0.0
        %416 = vmatpush1.msra.mxu0 0.0
        %417 = vmatprep.subr.mxu0 0.0
        %418 = vmatpush1.msra.mxu0 0.0
        %419 = vmatprep.subr.mxu0 0.0
        %420 = vmatpush1.msra.mxu0 0.0
        %421 = vmatprep.subr.mxu0 0.0
        %422 = vmatpush1.msra.mxu0 0.0
        %423 = vmatprep.subr.mxu0 0.0
        %424 = vmatpush1.msra.mxu0 0.0
        %425 = vmatprep.subr.mxu0 0.0
        %426 = vmatpush1.msra.mxu0 0.0
        %427 = vmatprep.subr.mxu0 0.0
        %428 = vmatpush1.msra.mxu0 0.0
        %429 = vmatprep.subr.mxu0 0.0
        %430 = vmatpush1.msra.mxu0 0.0
        %431 = vmatprep.subr.mxu0 0.0
        %432 = vmatpush1.msra.mxu0 0.0
        %433 = vmatprep.subr.mxu0 0.0
        %434 = vmatpush1.msra.mxu0 0.0
        %435 = vmatprep.subr.mxu0 0.0
        %436 = vmatpush1.msra.mxu0 0.0
        %437 = vmatprep.mubr.f32.mxu0 0.0
        %438 = vmatmul.mubr.f32.gmra.mrb[0].mxu0 %v362
        %v439 = vpop.f32.mrb[0].mxu0
        %v440 = vadd.f32 0.0, %v439
        %v441 = vpop.f32.mrb[0].mxu0
        %442 = vmatprep.mubr.f32.mxu0 0.0
        %443 = vmatmul.mubr.f32.gmra.mrb[0].mxu0 %v365
        %v444 = vpop.f32.mrb[0].mxu0
        %v445 = vadd.f32 0.0, %v444
        %v446 = vpop.f32.mrb[0].mxu0
        %447 = vmatprep.mubr.f32.mxu0 0.0
        %448 = vmatmul.mubr.f32.gmra.mrb[0].mxu0 %v368
        %v449 = vpop.f32.mrb[0].mxu0
        %v450 = vadd.f32 0.0, %v449
        %v451 = vpop.f32.mrb[0].mxu0
        %452 = vmatprep.mubr.f32.mxu0 0.0
        %453 = vmatmul.mubr.f32.gmra.mrb[0].mxu0 %v371
        %v454 = vpop.f32.mrb[0].mxu0
        %v455 = vadd.f32 0.0, %v454
        %v456 = vpop.f32.mrb[0].mxu0
        %457 = vdwg.mxu0
        %v459 = vsel %vm321, %v360, 0
        %461 = vmatprep.subr.mxu0 0.0
        %462 = vmatpush1.msra.mxu0 %v313
        %463 = vmatprep.subr.mxu0 0.0
        %464 = vmatpush1.msra.mxu0 %v314
        %465 = vmatprep.subr.mxu0 0.0
        %466 = vmatpush1.msra.mxu0 %v315
        %467 = vmatprep.subr.mxu0 0.0
        %468 = vmatpush1.msra.mxu0 %v316
        %469 = vmatprep.subr.mxu0 0.0
        %470 = vmatpush1.msra.mxu0 0.0
        %471 = vmatprep.subr.mxu0 0.0
        %472 = vmatpush1.msra.mxu0 0.0
        %473 = vmatprep.subr.mxu0 0.0
        %474 = vmatpush1.msra.mxu0 0.0
        %475 = vmatprep.subr.mxu0 0.0
        %476 = vmatpush1.msra.mxu0 0.0
        %477 = vmatprep.subr.mxu0 0.0
        %478 = vmatpush1.msra.mxu0 0.0
        %479 = vmatprep.subr.mxu0 0.0
        %480 = vmatpush1.msra.mxu0 0.0
        %481 = vmatprep.subr.mxu0 0.0
        %482 = vmatpush1.msra.mxu0 0.0
        %483 = vmatprep.subr.mxu0 0.0
        %484 = vmatpush1.msra.mxu0 0.0
        %485 = vmatprep.subr.mxu0 0.0
        %486 = vmatpush1.msra.mxu0 0.0
        %487 = vmatprep.subr.mxu0 0.0
        %488 = vmatpush1.msra.mxu0 0.0
        %489 = vmatprep.subr.mxu0 0.0
        %490 = vmatpush1.msra.mxu0 0.0
        %491 = vmatprep.subr.mxu0 0.0
        %492 = vmatpush1.msra.mxu0 0.0
        %493 = vmatprep.subr.mxu0 0.0
        %494 = vmatpush1.msra.mxu0 0.0
        %495 = vmatprep.subr.mxu0 0.0
        %496 = vmatpush1.msra.mxu0 0.0
        %497 = vmatprep.subr.mxu0 0.0
        %498 = vmatpush1.msra.mxu0 0.0
        %499 = vmatprep.subr.mxu0 0.0
        %500 = vmatpush1.msra.mxu0 0.0
        %501 = vmatprep.subr.mxu0 0.0
        %502 = vmatpush1.msra.mxu0 0.0
        %503 = vmatprep.subr.mxu0 0.0
        %504 = vmatpush1.msra.mxu0 0.0
        %505 = vmatprep.subr.mxu0 0.0
        %506 = vmatpush1.msra.mxu0 0.0
        %507 = vmatprep.subr.mxu0 0.0
        %508 = vmatpush1.msra.mxu0 0.0
        %509 = vmatprep.subr.mxu0 0.0
        %510 = vmatpush1.msra.mxu0 0.0
        %511 = vmatprep.subr.mxu0 0.0
        %512 = vmatpush1.msra.mxu0 0.0
        %513 = vmatprep.subr.mxu0 0.0
        %514 = vmatpush1.msra.mxu0 0.0
        %515 = vmatprep.subr.mxu0 0.0
        %516 = vmatpush1.msra.mxu0 0.0
        %517 = vmatprep.subr.mxu0 0.0
        %518 = vmatpush1.msra.mxu0 0.0
        %519 = vmatprep.subr.mxu0 0.0
        %520 = vmatpush1.msra.mxu0 0.0
        %521 = vmatprep.subr.mxu0 0.0
        %522 = vmatpush1.msra.mxu0 0.0
        %523 = vmatprep.subr.mxu0 0.0
        %524 = vmatpush1.msra.mxu0 0.0
        %525 = vmatprep.mubr.f32.mxu0 0.0
        %526 = vmatmul.mubr.f32.gmra.mrb[0].mxu0 %v459
        %v527 = vpop.f32.mrb[0].mxu0
        %v528 = vadd.f32 0.0, %v527
        %v529 = vpop.f32.mrb[0].mxu0
        %530 = vdwg.mxu0
        %v531 = vmul.f32 %v528, 0.35355338
        %532 = vmatprep.subr.mxu0 0.0
        %533 = vmatpush1.msra.mxu0 %v317
        %534 = vmatprep.subr.mxu0 0.0
        %535 = vmatpush1.msra.mxu0 %v318
        %536 = vmatprep.subr.mxu0 0.0
        %537 = vmatpush1.msra.mxu0 %v319
        %538 = vmatprep.subr.mxu0 0.0
        %539 = vmatpush1.msra.mxu0 %v320
        %540 = vmatprep.subr.mxu0 0.0
        %541 = vmatpush1.msra.mxu0 0.0
        %542 = vmatprep.subr.mxu0 0.0
        %543 = vmatpush1.msra.mxu0 0.0
        %544 = vmatprep.subr.mxu0 0.0
        %545 = vmatpush1.msra.mxu0 0.0
        %546 = vmatprep.subr.mxu0 0.0
        %547 = vmatpush1.msra.mxu0 0.0
        %548 = vmatprep.subr.mxu0 0.0
        %549 = vmatpush1.msra.mxu0 0.0
        %550 = vmatprep.subr.mxu0 0.0
        %551 = vmatpush1.msra.mxu0 0.0
        %552 = vmatprep.subr.mxu0 0.0
        %553 = vmatpush1.msra.mxu0 0.0
        %554 = vmatprep.subr.mxu0 0.0
        %555 = vmatpush1.msra.mxu0 0.0
        %556 = vmatprep.subr.mxu0 0.0
        %557 = vmatpush1.msra.mxu0 0.0
        %558 = vmatprep.subr.mxu0 0.0
        %559 = vmatpush1.msra.mxu0 0.0
        %560 = vmatprep.subr.mxu0 0.0
        %561 = vmatpush1.msra.mxu0 0.0
        %562 = vmatprep.subr.mxu0 0.0
        %563 = vmatpush1.msra.mxu0 0.0
        %564 = vmatprep.subr.mxu0 0.0
        %565 = vmatpush1.msra.mxu0 0.0
        %566 = vmatprep.subr.mxu0 0.0
        %567 = vmatpush1.msra.mxu0 0.0
        %568 = vmatprep.subr.mxu0 0.0
        %569 = vmatpush1.msra.mxu0 0.0
        %570 = vmatprep.subr.mxu0 0.0
        %571 = vmatpush1.msra.mxu0 0.0
        %572 = vmatprep.subr.mxu0 0.0
        %573 = vmatpush1.msra.mxu0 0.0
        %574 = vmatprep.subr.mxu0 0.0
        %575 = vmatpush1.msra.mxu0 0.0
        %576 = vmatprep.subr.mxu0 0.0
        %577 = vmatpush1.msra.mxu0 0.0
        %578 = vmatprep.subr.mxu0 0.0
        %579 = vmatpush1.msra.mxu0 0.0
        %580 = vmatprep.subr.mxu0 0.0
        %581 = vmatpush1.msra.mxu0 0.0
        %582 = vmatprep.subr.mxu0 0.0
        %583 = vmatpush1.msra.mxu0 0.0
        %584 = vmatprep.subr.mxu0 0.0
        %585 = vmatpush1.msra.mxu0 0.0
        %586 = vmatprep.subr.mxu0 0.0
        %587 = vmatpush1.msra.mxu0 0.0
        %588 = vmatprep.subr.mxu0 0.0
        %589 = vmatpush1.msra.mxu0 0.0
        %590 = vmatprep.subr.mxu0 0.0
        %591 = vmatpush1.msra.mxu0 0.0
        %592 = vmatprep.subr.mxu0 0.0
        %593 = vmatpush1.msra.mxu0 0.0
        %594 = vmatprep.subr.mxu0 0.0
        %595 = vmatpush1.msra.mxu0 0.0
        %596 = vmatprep.mubr.f32.mxu0 0.0
        %597 = vmatmul.mubr.f32.gmra.mrb[0].mxu0 %v459
        %v598 = vpop.f32.mrb[0].mxu0
        %v599 = vadd.f32 0.0, %v598
        %v600 = vpop.f32.mrb[0].mxu0
        %601 = vdwg.mxu0
        %v602 = vmul.f32 %v531, %v301
        %v603 = vmul.f32 %v531, %v302
        %v604 = vmul.f32 %v531, %v303
        %v605 = vmul.f32 %v531, %v304
        %v606 = vmul.f32 %v599, %v301
        %v607 = vmul.f32 %v599, %v302
        %v608 = vmul.f32 %v599, %v303
        %v609 = vmul.f32 %v599, %v304
        %v611 = vsel %vm321, %v440, 0
        %v614 = vsel %vm321, %v445, 0
        %v617 = vsel %vm321, %v450, 0
        %v620 = vsel %vm321, %v455, 0
        %v623 = vsel %vm321, %v602, 0
        %v626 = vsel %vm321, %v603, 0
        %v629 = vsel %vm321, %v604, 0
        %v632 = vsel %vm321, %v605, 0
        %634 = vmatprep.subr.mxu0 0.0
        %635 = vmatpush1.xpose.msra.mxu0 %v623
        %636 = vmatprep.subr.mxu0 0.0
        %637 = vmatpush1.xpose.msra.mxu0 %v626
        %638 = vmatprep.subr.mxu0 0.0
        %639 = vmatpush1.xpose.msra.mxu0 %v629
        %640 = vmatprep.subr.mxu0 0.0
        %641 = vmatpush1.xpose.msra.mxu0 %v632
        %642 = vmatprep.subr.mxu0 0.0
        %643 = vmatpush1.xpose.msra.mxu0 0.0
        %644 = vmatprep.subr.mxu0 0.0
        %645 = vmatpush1.xpose.msra.mxu0 0.0
        %646 = vmatprep.subr.mxu0 0.0
        %647 = vmatpush1.xpose.msra.mxu0 0.0
        %648 = vmatprep.subr.mxu0 0.0
        %649 = vmatpush1.xpose.msra.mxu0 0.0
        %650 = vmatprep.subr.mxu0 0.0
        %651 = vmatpush1.xpose.msra.mxu0 0.0
        %652 = vmatprep.subr.mxu0 0.0
        %653 = vmatpush1.xpose.msra.mxu0 0.0
        %654 = vmatprep.subr.mxu0 0.0
        %655 = vmatpush1.xpose.msra.mxu0 0.0
        %656 = vmatprep.subr.mxu0 0.0
        %657 = vmatpush1.xpose.msra.mxu0 0.0
        %658 = vmatprep.subr.mxu0 0.0
        %659 = vmatpush1.xpose.msra.mxu0 0.0
        %660 = vmatprep.subr.mxu0 0.0
        %661 = vmatpush1.xpose.msra.mxu0 0.0
        %662 = vmatprep.subr.mxu0 0.0
        %663 = vmatpush1.xpose.msra.mxu0 0.0
        %664 = vmatprep.subr.mxu0 0.0
        %665 = vmatpush1.xpose.msra.mxu0 0.0
        %666 = vmatprep.subr.mxu0 0.0
        %667 = vmatpush1.xpose.msra.mxu0 0.0
        %668 = vmatprep.subr.mxu0 0.0
        %669 = vmatpush1.xpose.msra.mxu0 0.0
        %670 = vmatprep.subr.mxu0 0.0
        %671 = vmatpush1.xpose.msra.mxu0 0.0
        %672 = vmatprep.subr.mxu0 0.0
        %673 = vmatpush1.xpose.msra.mxu0 0.0
        %674 = vmatprep.subr.mxu0 0.0
        %675 = vmatpush1.xpose.msra.mxu0 0.0
        %676 = vmatprep.subr.mxu0 0.0
        %677 = vmatpush1.xpose.msra.mxu0 0.0
        %678 = vmatprep.subr.mxu0 0.0
        %679 = vmatpush1.xpose.msra.mxu0 0.0
        %680 = vmatprep.subr.mxu0 0.0
        %681 = vmatpush1.xpose.msra.mxu0 0.0
        %682 = vmatprep.subr.mxu0 0.0
        %683 = vmatpush1.xpose.msra.mxu0 0.0
        %684 = vmatprep.subr.mxu0 0.0
        %685 = vmatpush1.xpose.msra.mxu0 0.0
        %686 = vmatprep.subr.mxu0 0.0
        %687 = vmatpush1.xpose.msra.mxu0 0.0
        %688 = vmatprep.subr.mxu0 0.0
        %689 = vmatpush1.xpose.msra.mxu0 0.0
        %690 = vmatprep.subr.mxu0 0.0
        %691 = vmatpush1.xpose.msra.mxu0 0.0
        %692 = vmatprep.subr.mxu0 0.0
        %693 = vmatpush1.xpose.msra.mxu0 0.0
        %694 = vmatprep.subr.mxu0 0.0
        %695 = vmatpush1.xpose.msra.mxu0 0.0
        %696 = vmatprep.subr.mxu0 0.0
        %697 = vmatpush1.xpose.msra.mxu0 0.0
        %698 = vmatprep.mubr.f32.mxu0 0.0
        %699 = vmatmul.mubr.f32.gmra.mrb[0].mxu0 %v611
        %v700 = vpop.f32.mrb[0].mxu0
        %v701 = vadd.f32 0.0, %v700
        %v702 = vpop.f32.mrb[0].mxu0
        %703 = vmatprep.mubr.f32.mxu0 0.0
        %704 = vmatmul.mubr.f32.gmra.mrb[0].mxu0 %v614
        %v705 = vpop.f32.mrb[0].mxu0
        %v706 = vadd.f32 0.0, %v705
        %v707 = vpop.f32.mrb[0].mxu0
        %708 = vmatprep.mubr.f32.mxu0 0.0
        %709 = vmatmul.mubr.f32.gmra.mrb[0].mxu0 %v617
        %v710 = vpop.f32.mrb[0].mxu0
        %v711 = vadd.f32 0.0, %v710
        %v712 = vpop.f32.mrb[0].mxu0
        %713 = vmatprep.mubr.f32.mxu0 0.0
        %714 = vmatmul.mubr.f32.gmra.mrb[0].mxu0 %v620
        %v715 = vpop.f32.mrb[0].mxu0
        %v716 = vadd.f32 0.0, %v715
        %v717 = vpop.f32.mrb[0].mxu0
        %718 = vdwg.mxu0
        %v719 = vmax.f32 %v701, 0.0
        %v720 = vmax.f32 %v706, 0.0
        %v721 = vmax.f32 %v711, 0.0
        %v722 = vmax.f32 %v716, 0.0
        %v724 = vsel %vm321, %v719, 0
        %v727 = vsel %vm321, %v720, 0
        %v730 = vsel %vm321, %v721, 0
        %v733 = vsel %vm321, %v722, 0
        %735 = vmatprep.subr.mxu0 0.0
        %736 = vmatpush1.msra.mxu0 %v606
        %737 = vmatprep.subr.mxu0 0.0
        %738 = vmatpush1.msra.mxu0 %v607
        %739 = vmatprep.subr.mxu0 0.0
        %740 = vmatpush1.msra.mxu0 %v608
        %741 = vmatprep.subr.mxu0 0.0
        %742 = vmatpush1.msra.mxu0 %v609
        %743 = vmatprep.subr.mxu0 0.0
        %744 = vmatpush1.msra.mxu0 0.0
        %745 = vmatprep.subr.mxu0 0.0
        %746 = vmatpush1.msra.mxu0 0.0
        %747 = vmatprep.subr.mxu0 0.0
        %748 = vmatpush1.msra.mxu0 0.0
        %749 = vmatprep.subr.mxu0 0.0
        %750 = vmatpush1.msra.mxu0 0.0
        %751 = vmatprep.subr.mxu0 0.0
        %752 = vmatpush1.msra.mxu0 0.0
        %753 = vmatprep.subr.mxu0 0.0
        %754 = vmatpush1.msra.mxu0 0.0
        %755 = vmatprep.subr.mxu0 0.0
        %756 = vmatpush1.msra.mxu0 0.0
        %757 = vmatprep.subr.mxu0 0.0
        %758 = vmatpush1.msra.mxu0 0.0
        %759 = vmatprep.subr.mxu0 0.0
        %760 = vmatpush1.msra.mxu0 0.0
        %761 = vmatprep.subr.mxu0 0.0
        %762 = vmatpush1.msra.mxu0 0.0
        %763 = vmatprep.subr.mxu0 0.0
        %764 = vmatpush1.msra.mxu0 0.0
        %765 = vmatprep.subr.mxu0 0.0
        %766 = vmatpush1.msra.mxu0 0.0
        %767 = vmatprep.subr.mxu0 0.0
        %768 = vmatpush1.msra.mxu0 0.0
        %769 = vmatprep.subr.mxu0 0.0
        %770 = vmatpush1.msra.mxu0 0.0
        %771 = vmatprep.subr.mxu0 0.0
        %772 = vmatpush1.msra.mxu0 0.0
        %773 = vmatprep.subr.mxu0 0.0
        %774 = vmatpush1.msra.mxu0 0.0
        %775 = vmatprep.subr.mxu0 0.0
        %776 = vmatpush1.msra.mxu0 0.0
        %777 = vmatprep.subr.mxu0 0.0
        %778 = vmatpush1.msra.mxu0 0.0
        %779 = vmatprep.subr.mxu0 0.0
        %780 = vmatpush1.msra.mxu0 0.0
        %781 = vmatprep.subr.mxu0 0.0
        %782 = vmatpush1.msra.mxu0 0.0
        %783 = vmatprep.subr.mxu0 0.0
        %784 = vmatpush1.msra.mxu0 0.0
        %785 = vmatprep.subr.mxu0 0.0
        %786 = vmatpush1.msra.mxu0 0.0
        %787 = vmatprep.subr.mxu0 0.0
        %788 = vmatpush1.msra.mxu0 0.0
        %789 = vmatprep.subr.mxu0 0.0
        %790 = vmatpush1.msra.mxu0 0.0
        %791 = vmatprep.subr.mxu0 0.0
        %792 = vmatpush1.msra.mxu0 0.0
        %793 = vmatprep.subr.mxu0 0.0
        %794 = vmatpush1.msra.mxu0 0.0
        %795 = vmatprep.subr.mxu0 0.0
        %796 = vmatpush1.msra.mxu0 0.0
        %797 = vmatprep.subr.mxu0 0.0
        %798 = vmatpush1.msra.mxu0 0.0
        %799 = vmatprep.mubr.f32.mxu0 0.0
        %800 = vmatmul.mubr.f32.gmra.mrb[0].mxu0 %v724
        %v801 = vpop.f32.mrb[0].mxu0
        %v802 = vadd.f32 0.0, %v801
        %v803 = vpop.f32.mrb[0].mxu0
        %804 = vmatprep.mubr.f32.mxu0 0.0
        %805 = vmatmul.mubr.f32.gmra.mrb[0].mxu0 %v727
        %v806 = vpop.f32.mrb[0].mxu0
        %v807 = vadd.f32 0.0, %v806
        %v808 = vpop.f32.mrb[0].mxu0
        %809 = vmatprep.mubr.f32.mxu0 0.0
        %810 = vmatmul.mubr.f32.gmra.mrb[0].mxu0 %v730
        %v811 = vpop.f32.mrb[0].mxu0
        %v812 = vadd.f32 0.0, %v811
        %v813 = vpop.f32.mrb[0].mxu0
        %814 = vmatprep.mubr.f32.mxu0 0.0
        %815 = vmatmul.mubr.f32.gmra.mrb[0].mxu0 %v733
        %v816 = vpop.f32.mrb[0].mxu0
        %v817 = vadd.f32 0.0, %v816
        %v818 = vpop.f32.mrb[0].mxu0
        %819 = vdwg.mxu0
        %v820 = vadd.f32 %v802, %v599
        %v821 = vadd.f32 %v807, %v599
        %v822 = vadd.f32 %v812, %v599
        %v823 = vadd.f32 %v817, %v599
        %s824 = scalar_lea.vmem [#allocation5], 32
        %v825 = vld [vmem:[%s824] sm:$0xff]
        %v826 = vld [vmem:[%s824 + $0x8] sm:$0xff]
        %v827 = vld [vmem:[%s824 + $0x10] sm:$0xff]
        %v828 = vld [vmem:[%s824 + $0x18] sm:$0xff]
        %s829 = scalar_lea.vmem [#allocation7], 32
        %v830 = vld [vmem:[%s829] sm:$0xff]
        %v831 = vld [vmem:[%s829 + $0x8] sm:$0xff]
        %v832 = vld [vmem:[%s829 + $0x10] sm:$0xff]
        %v833 = vld [vmem:[%s829 + $0x18] sm:$0xff]
        %s834 = scalar_lea.vmem [#allocation8], 32
        %v835 = vld [vmem:[%s834] sm:$0xff]
        %v836 = vld [vmem:[%s834 + $0x8] sm:$0xff]
        %v837 = vld [vmem:[%s834 + $0x10] sm:$0xff]
        %v838 = vld [vmem:[%s834 + $0x18] sm:$0xff]
        %v839 = vsel %vm321, %v820, -inf
        %v840 = vsel %vm321, %v821, -inf
        %v841 = vsel %vm321, %v822, -inf
        %v842 = vsel %vm321, %v823, -inf
        %v843 = vmax.f32 %v839, %v840
        %v844 = vmax.f32 %v841, %v842
        %v845 = vmax.f32 %v843, %v844
        %v846 = vsub.f32 %v820, %v845
        %v847 = vsub.f32 %v821, %v845
        %v848 = vsub.f32 %v822, %v845
        %v849 = vsub.f32 %v823, %v845
        %v850 = vmul.f32 %v846, 1.442695
        %v851 = vpow.pop %v850
        %v852 = vmul.f32 %v847, 1.442695
        %v853 = vpow.pop %v852
        %v854 = vmul.f32 %v848, 1.442695
        %v855 = vpow.pop %v854
        %v856 = vmul.f32 %v849, 1.442695
        %v857 = vpow.pop %v856
        %v858 = vsel %vm321, %v851, 0.0
        %v859 = vsel %vm321, %v853, 0.0
        %v860 = vadd.f32 %v858, %v859
        %v861 = vsel %vm321, %v855, 0.0
        %v862 = vadd.f32 %v860, %v861
        %v863 = vsel %vm321, %v857, 0.0
        %v864 = vadd.f32 %v862, %v863
        %v865 = vmul.f32 %v820, %v851
        %v866 = vmul.f32 %v821, %v853
        %v867 = vmul.f32 %v822, %v855
        %v868 = vmul.f32 %v823, %v857
        %v869 = vsel %vm321, %v865, 0.0
        %v870 = vsel %vm321, %v866, 0.0
        %v871 = vadd.f32 %v869, %v870
        %v872 = vsel %vm321, %v867, 0.0
        %v873 = vadd.f32 %v871, %v872
        %v874 = vsel %vm321, %v868, 0.0
        %v875 = vadd.f32 %v873, %v874
        %v876 = vrcp.pop %v864
        %v877 = vmul.f32 %v875, %v876
        %v879 = vsel %vm321, %v820, 0
        %v882 = vsel %vm321, %v821, 0
        %v885 = vsel %vm321, %v822, 0
        %v888 = vsel %vm321, %v823, 0
        %890 = vmatprep.subr.mxu0 0.0
        %891 = vmatpush1.msra.mxu0 %v825
        %892 = vmatprep.subr.mxu0 0.0
        %893 = vmatpush1.msra.mxu0 %v826
        %894 = vmatprep.subr.mxu0 0.0
        %895 = vmatpush1.msra.mxu0 %v827
        %896 = vmatprep.subr.mxu0 0.0
        %897 = vmatpush1.msra.mxu0 %v828
        %898 = vmatprep.subr.mxu0 0.0
        %899 = vmatpush1.msra.mxu0 0.0
        %900 = vmatprep.subr.mxu0 0.0
        %901 = vmatpush1.msra.mxu0 0.0
        %902 = vmatprep.subr.mxu0 0.0
        %903 = vmatpush1.msra.mxu0 0.0
        %904 = vmatprep.subr.mxu0 0.0
        %905 = vmatpush1.msra.mxu0 0.0
        %906 = vmatprep.subr.mxu0 0.0
        %907 = vmatpush1.msra.mxu0 0.0
        %908 = vmatprep.subr.mxu0 0.0
        %909 = vmatpush1.msra.mxu0 0.0
        %910 = vmatprep.subr.mxu0 0.0
        %911 = vmatpush1.msra.mxu0 0.0
        %912 = vmatprep.subr.mxu0 0.0
        %913 = vmatpush1.msra.mxu0 0.0
        %914 = vmatprep.subr.mxu0 0.0
        %915 = vmatpush1.msra.mxu0 0.0
        %916 = vmatprep.subr.mxu0 0.0
        %917 = vmatpush1.msra.mxu0 0.0
        %918 = vmatprep.subr.mxu0 0.0
        %919 = vmatpush1.msra.mxu0 0.0
        %920 = vmatprep.subr.mxu0 0.0
        %921 = vmatpush1.msra.mxu0 0.0
        %922 = vmatprep.subr.mxu0 0.0
        %923 = vmatpush1.msra.mxu0 0.0
        %924 = vmatprep.subr.mxu0 0.0
        %925 = vmatpush1.msra.mxu0 0.0
        %926 = vmatprep.subr.mxu0 0.0
        %927 = vmatpush1.msra.mxu0 0.0
        %928 = vmatprep.subr.mxu0 0.0
        %929 = vmatpush1.msra.mxu0 0.0
        %930 = vmatprep.subr.mxu0 0.0
        %931 = vmatpush1.msra.mxu0 0.0
        %932 = vmatprep.subr.mxu0 0.0
        %933 = vmatpush1.msra.mxu0 0.0
        %934 = vmatprep.subr.mxu0 0.0
        %935 = vmatpush1.msra.mxu0 0.0
        %936 = vmatprep.subr.mxu0 0.0
        %937 = vmatpush1.msra.mxu0 0.0
        %938 = vmatprep.subr.mxu0 0.0
        %939 = vmatpush1.msra.mxu0 0.0
        %940 = vmatprep.subr.mxu0 0.0
        %941 = vmatpush1.msra.mxu0 0.0
        %942 = vmatprep.subr.mxu0 0.0
        %943 = vmatpush1.msra.mxu0 0.0
        %944 = vmatprep.subr.mxu0 0.0
        %945 = vmatpush1.msra.mxu0 0.0
        %946 = vmatprep.subr.mxu0 0.0
        %947 = vmatpush1.msra.mxu0 0.0
        %948 = vmatprep.subr.mxu0 0.0
        %949 = vmatpush1.msra.mxu0 0.0
        %950 = vmatprep.subr.mxu0 0.0
        %951 = vmatpush1.msra.mxu0 0.0
        %952 = vmatprep.subr.mxu0 0.0
        %953 = vmatpush1.msra.mxu0 0.0
        %954 = vmatprep.mubr.f32.mxu0 0.0
        %955 = vmatmul.mubr.f32.gmra.mrb[0].mxu0 %v879
        %v956 = vpop.f32.mrb[0].mxu0
        %v957 = vadd.f32 0.0, %v956
        %v958 = vpop.f32.mrb[0].mxu0
        %959 = vmatprep.mubr.f32.mxu0 0.0
        %960 = vmatmul.mubr.f32.gmra.mrb[0].mxu0 %v882
        %v961 = vpop.f32.mrb[0].mxu0
        %v962 = vadd.f32 0.0, %v961
        %v963 = vpop.f32.mrb[0].mxu0
        %964 = vmatprep.mubr.f32.mxu0 0.0
        %965 = vmatmul.mubr.f32.gmra.mrb[0].mxu0 %v885
        %v966 = vpop.f32.mrb[0].mxu0
        %v967 = vadd.f32 0.0, %v966
        %v968 = vpop.f32.mrb[0].mxu0
        %969 = vmatprep.mubr.f32.mxu0 0.0
        %970 = vmatmul.mubr.f32.gmra.mrb[0].mxu0 %v888
        %v971 = vpop.f32.mrb[0].mxu0
        %v972 = vadd.f32 0.0, %v971
        %v973 = vpop.f32.mrb[0].mxu0
        %974 = vdwg.mxu0
        %v976 = vsel %vm321, %v877, 0
        %978 = vmatprep.subr.mxu0 0.0
        %979 = vmatpush1.msra.mxu0 %v830
        %980 = vmatprep.subr.mxu0 0.0
        %981 = vmatpush1.msra.mxu0 %v831
        %982 = vmatprep.subr.mxu0 0.0
        %983 = vmatpush1.msra.mxu0 %v832
        %984 = vmatprep.subr.mxu0 0.0
        %985 = vmatpush1.msra.mxu0 %v833
        %986 = vmatprep.subr.mxu0 0.0
        %987 = vmatpush1.msra.mxu0 0.0
        %988 = vmatprep.subr.mxu0 0.0
        %989 = vmatpush1.msra.mxu0 0.0
        %990 = vmatprep.subr.mxu0 0.0
        %991 = vmatpush1.msra.mxu0 0.0
        %992 = vmatprep.subr.mxu0 0.0
        %993 = vmatpush1.msra.mxu0 0.0
        %994 = vmatprep.subr.mxu0 0.0
        %995 = vmatpush1.msra.mxu0 0.0
        %996 = vmatprep.subr.mxu0 0.0
        %997 = vmatpush1.msra.mxu0 0.0
        %998 = vmatprep.subr.mxu0 0.0
        %999 = vmatpush1.msra.mxu0 0.0
        %1000 = vmatprep.subr.mxu0 0.0
        %1001 = vmatpush1.msra.mxu0 0.0
        %1002 = vmatprep.subr.mxu0 0.0
        %1003 = vmatpush1.msra.mxu0 0.0
        %1004 = vmatprep.subr.mxu0 0.0
        %1005 = vmatpush1.msra.mxu0 0.0
        %1006 = vmatprep.subr.mxu0 0.0
        %1007 = vmatpush1.msra.mxu0 0.0
        %1008 = vmatprep.subr.mxu0 0.0
        %1009 = vmatpush1.msra.mxu0 0.0
        %1010 = vmatprep.subr.mxu0 0.0
        %1011 = vmatpush1.msra.mxu0 0.0
        %1012 = vmatprep.subr.mxu0 0.0
        %1013 = vmatpush1.msra.mxu0 0.0
        %1014 = vmatprep.subr.mxu0 0.0
        %1015 = vmatpush1.msra.mxu0 0.0
        %1016 = vmatprep.subr.mxu0 0.0
        %1017 = vmatpush1.msra.mxu0 0.0
        %1018 = vmatprep.subr.mxu0 0.0
        %1019 = vmatpush1.msra.mxu0 0.0
        %1020 = vmatprep.subr.mxu0 0.0
        %1021 = vmatpush1.msra.mxu0 0.0
        %1022 = vmatprep.subr.mxu0 0.0
        %1023 = vmatpush1.msra.mxu0 0.0
        %1024 = vmatprep.subr.mxu0 0.0
        %1025 = vmatpush1.msra.mxu0 0.0
        %1026 = vmatprep.subr.mxu0 0.0
        %1027 = vmatpush1.msra.mxu0 0.0
        %1028 = vmatprep.subr.mxu0 0.0
        %1029 = vmatpush1.msra.mxu0 0.0
        %1030 = vmatprep.subr.mxu0 0.0
        %1031 = vmatpush1.msra.mxu0 0.0
        %1032 = vmatprep.subr.mxu0 0.0
        %1033 = vmatpush1.msra.mxu0 0.0
        %1034 = vmatprep.subr.mxu0 0.0
        %1035 = vmatpush1.msra.mxu0 0.0
        %1036 = vmatprep.subr.mxu0 0.0
        %1037 = vmatpush1.msra.mxu0 0.0
        %1038 = vmatprep.subr.mxu0 0.0
        %1039 = vmatpush1.msra.mxu0 0.0
        %1040 = vmatprep.subr.mxu0 0.0
        %1041 = vmatpush1.msra.mxu0 0.0
        %1042 = vmatprep.mubr.f32.mxu0 0.0
        %1043 = vmatmul.mubr.f32.gmra.mrb[0].mxu0 %v976
        %v1044 = vpop.f32.mrb[0].mxu0
        %v1045 = vadd.f32 0.0, %v1044
        %v1046 = vpop.f32.mrb[0].mxu0
        %1047 = vdwg.mxu0
        %v1048 = vmul.f32 %v1045, 0.35355338
        %1049 = vmatprep.subr.mxu0 0.0
        %1050 = vmatpush1.msra.mxu0 %v835
        %1051 = vmatprep.subr.mxu0 0.0
        %1052 = vmatpush1.msra.mxu0 %v836
        %1053 = vmatprep.subr.mxu0 0.0
        %1054 = vmatpush1.msra.mxu0 %v837
        %1055 = vmatprep.subr.mxu0 0.0
        %1056 = vmatpush1.msra.mxu0 %v838
        %1057 = vmatprep.subr.mxu0 0.0
        %1058 = vmatpush1.msra.mxu0 0.0
        %1059 = vmatprep.subr.mxu0 0.0
        %1060 = vmatpush1.msra.mxu0 0.0
        %1061 = vmatprep.subr.mxu0 0.0
        %1062 = vmatpush1.msra.mxu0 0.0
        %1063 = vmatprep.subr.mxu0 0.0
        %1064 = vmatpush1.msra.mxu0 0.0
        %1065 = vmatprep.subr.mxu0 0.0
        %1066 = vmatpush1.msra.mxu0 0.0
        %1067 = vmatprep.subr.mxu0 0.0
        %1068 = vmatpush1.msra.mxu0 0.0
        %1069 = vmatprep.subr.mxu0 0.0
        %1070 = vmatpush1.msra.mxu0 0.0
        %1071 = vmatprep.subr.mxu0 0.0
        %1072 = vmatpush1.msra.mxu0 0.0
        %1073 = vmatprep.subr.mxu0 0.0
        %1074 = vmatpush1.msra.mxu0 0.0
        %1075 = vmatprep.subr.mxu0 0.0
        %1076 = vmatpush1.msra.mxu0 0.0
        %1077 = vmatprep.subr.mxu0 0.0
        %1078 = vmatpush1.msra.mxu0 0.0
        %1079 = vmatprep.subr.mxu0 0.0
        %1080 = vmatpush1.msra.mxu0 0.0
        %1081 = vmatprep.subr.mxu0 0.0
        %1082 = vmatpush1.msra.mxu0 0.0
        %1083 = vmatprep.subr.mxu0 0.0
        %1084 = vmatpush1.msra.mxu0 0.0
        %1085 = vmatprep.subr.mxu0 0.0
        %1086 = vmatpush1.msra.mxu0 0.0
        %1087 = vmatprep.subr.mxu0 0.0
        %1088 = vmatpush1.msra.mxu0 0.0
        %1089 = vmatprep.subr.mxu0 0.0
        %1090 = vmatpush1.msra.mxu0 0.0
        %1091 = vmatprep.subr.mxu0 0.0
        %1092 = vmatpush1.msra.mxu0 0.0
        %1093 = vmatprep.subr.mxu0 0.0
        %1094 = vmatpush1.msra.mxu0 0.0
        %1095 = vmatprep.subr.mxu0 0.0
        %1096 = vmatpush1.msra.mxu0 0.0
        %1097 = vmatprep.subr.mxu0 0.0
        %1098 = vmatpush1.msra.mxu0 0.0
        %1099 = vmatprep.subr.mxu0 0.0
        %1100 = vmatpush1.msra.mxu0 0.0
        %1101 = vmatprep.subr.mxu0 0.0
        %1102 = vmatpush1.msra.mxu0 0.0
        %1103 = vmatprep.subr.mxu0 0.0
        %1104 = vmatpush1.msra.mxu0 0.0
        %1105 = vmatprep.subr.mxu0 0.0
        %1106 = vmatpush1.msra.mxu0 0.0
        %1107 = vmatprep.subr.mxu0 0.0
        %1108 = vmatpush1.msra.mxu0 0.0
        %1109 = vmatprep.subr.mxu0 0.0
        %1110 = vmatpush1.msra.mxu0 0.0
        %1111 = vmatprep.subr.mxu0 0.0
        %1112 = vmatpush1.msra.mxu0 0.0
        %1113 = vmatprep.mubr.f32.mxu0 0.0
        %1114 = vmatmul.mubr.f32.gmra.mrb[0].mxu0 %v976
        %v1115 = vpop.f32.mrb[0].mxu0
        %v1116 = vadd.f32 0.0, %v1115
        %v1117 = vpop.f32.mrb[0].mxu0
        %1118 = vdwg.mxu0
        %v1119 = vmul.f32 %v1048, %v301
        %v1120 = vmul.f32 %v1048, %v302
        %v1121 = vmul.f32 %v1048, %v303
        %v1122 = vmul.f32 %v1048, %v304
        %v1123 = vmul.f32 %v1116, %v301
        %v1124 = vmul.f32 %v1116, %v302
        %v1125 = vmul.f32 %v1116, %v303
        %v1126 = vmul.f32 %v1116, %v304
        %v1128 = vsel %vm321, %v957, 0
        %v1131 = vsel %vm321, %v962, 0
        %v1134 = vsel %vm321, %v967, 0
        %v1137 = vsel %vm321, %v972, 0
        %v1140 = vsel %vm321, %v1119, 0
        %v1143 = vsel %vm321, %v1120, 0
        %v1146 = vsel %vm321, %v1121, 0
        %v1149 = vsel %vm321, %v1122, 0
        %1151 = vmatprep.subr.mxu0 0.0
        %1152 = vmatpush1.xpose.msra.mxu0 %v1140
        %1153 = vmatprep.subr.mxu0 0.0
        %1154 = vmatpush1.xpose.msra.mxu0 %v1143
        %1155 = vmatprep.subr.mxu0 0.0
        %1156 = vmatpush1.xpose.msra.mxu0 %v1146
        %1157 = vmatprep.subr.mxu0 0.0
        %1158 = vmatpush1.xpose.msra.mxu0 %v1149
        %1159 = vmatprep.subr.mxu0 0.0
        %1160 = vmatpush1.xpose.msra.mxu0 0.0
        %1161 = vmatprep.subr.mxu0 0.0
        %1162 = vmatpush1.xpose.msra.mxu0 0.0
        %1163 = vmatprep.subr.mxu0 0.0
        %1164 = vmatpush1.xpose.msra.mxu0 0.0
        %1165 = vmatprep.subr.mxu0 0.0
        %1166 = vmatpush1.xpose.msra.mxu0 0.0
        %1167 = vmatprep.subr.mxu0 0.0
        %1168 = vmatpush1.xpose.msra.mxu0 0.0
        %1169 = vmatprep.subr.mxu0 0.0
        %1170 = vmatpush1.xpose.msra.mxu0 0.0
        %1171 = vmatprep.subr.mxu0 0.0
        %1172 = vmatpush1.xpose.msra.mxu0 0.0
        %1173 = vmatprep.subr.mxu0 0.0
        %1174 = vmatpush1.xpose.msra.mxu0 0.0
        %1175 = vmatprep.subr.mxu0 0.0
        %1176 = vmatpush1.xpose.msra.mxu0 0.0
        %1177 = vmatprep.subr.mxu0 0.0
        %1178 = vmatpush1.xpose.msra.mxu0 0.0
        %1179 = vmatprep.subr.mxu0 0.0
        %1180 = vmatpush1.xpose.msra.mxu0 0.0
        %1181 = vmatprep.subr.mxu0 0.0
        %1182 = vmatpush1.xpose.msra.mxu0 0.0
        %1183 = vmatprep.subr.mxu0 0.0
        %1184 = vmatpush1.xpose.msra.mxu0 0.0
        %1185 = vmatprep.subr.mxu0 0.0
        %1186 = vmatpush1.xpose.msra.mxu0 0.0
        %1187 = vmatprep.subr.mxu0 0.0
        %1188 = vmatpush1.xpose.msra.mxu0 0.0
        %1189 = vmatprep.subr.mxu0 0.0
        %1190 = vmatpush1.xpose.msra.mxu0 0.0
        %1191 = vmatprep.subr.mxu0 0.0
        %1192 = vmatpush1.xpose.msra.mxu0 0.0
        %1193 = vmatprep.subr.mxu0 0.0
        %1194 = vmatpush1.xpose.msra.mxu0 0.0
        %1195 = vmatprep.subr.mxu0 0.0
        %1196 = vmatpush1.xpose.msra.mxu0 0.0
        %1197 = vmatprep.subr.mxu0 0.0
        %1198 = vmatpush1.xpose.msra.mxu0 0.0
        %1199 = vmatprep.subr.mxu0 0.0
        %1200 = vmatpush1.xpose.msra.mxu0 0.0
        %1201 = vmatprep.subr.mxu0 0.0
        %1202 = vmatpush1.xpose.msra.mxu0 0.0
        %1203 = vmatprep.subr.mxu0 0.0
        %1204 = vmatpush1.xpose.msra.mxu0 0.0
        %1205 = vmatprep.subr.mxu0 0.0
        %1206 = vmatpush1.xpose.msra.mxu0 0.0
        %1207 = vmatprep.subr.mxu0 0.0
        %1208 = vmatpush1.xpose.msra.mxu0 0.0
        %1209 = vmatprep.subr.mxu0 0.0
        %1210 = vmatpush1.xpose.msra.mxu0 0.0
        %1211 = vmatprep.subr.mxu0 0.0
        %1212 = vmatpush1.xpose.msra.mxu0 0.0
        %1213 = vmatprep.subr.mxu0 0.0
        %1214 = vmatpush1.xpose.msra.mxu0 0.0
        %1215 = vmatprep.mubr.f32.mxu0 0.0
        %1216 = vmatmul.mubr.f32.gmra.mrb[0].mxu0 %v1128
        %v1217 = vpop.f32.mrb[0].mxu0
        %v1218 = vadd.f32 0.0, %v1217
        %v1219 = vpop.f32.mrb[0].mxu0
        %1220 = vmatprep.mubr.f32.mxu0 0.0
        %1221 = vmatmul.mubr.f32.gmra.mrb[0].mxu0 %v1131
        %v1222 = vpop.f32.mrb[0].mxu0
        %v1223 = vadd.f32 0.0, %v1222
        %v1224 = vpop.f32.mrb[0].mxu0
        %1225 = vmatprep.mubr.f32.mxu0 0.0
        %1226 = vmatmul.mubr.f32.gmra.mrb[0].mxu0 %v1134
        %v1227 = vpop.f32.mrb[0].mxu0
        %v1228 = vadd.f32 0.0, %v1227
        %v1229 = vpop.f32.mrb[0].mxu0
        %1230 = vmatprep.mubr.f32.mxu0 0.0
        %1231 = vmatmul.mubr.f32.gmra.mrb[0].mxu0 %v1137
        %v1232 = vpop.f32.mrb[0].mxu0
        %v1233 = vadd.f32 0.0, %v1232
        %v1234 = vpop.f32.mrb[0].mxu0
        %1235 = vdwg.mxu0
        %v1236 = vmax.f32 %v1218, 0.0
        %v1237 = vmax.f32 %v1223, 0.0
        %v1238 = vmax.f32 %v1228, 0.0
        %v1239 = vmax.f32 %v1233, 0.0
        %v1241 = vsel %vm321, %v1236, 0
        %v1244 = vsel %vm321, %v1237, 0
        %v1247 = vsel %vm321, %v1238, 0
        %v1250 = vsel %vm321, %v1239, 0
        %1252 = vmatprep.subr.mxu0 0.0
        %1253 = vmatpush1.msra.mxu0 %v1123
        %1254 = vmatprep.subr.mxu0 0.0
        %1255 = vmatpush1.msra.mxu0 %v1124
        %1256 = vmatprep.subr.mxu0 0.0
        %1257 = vmatpush1.msra.mxu0 %v1125
        %1258 = vmatprep.subr.mxu0 0.0
        %1259 = vmatpush1.msra.mxu0 %v1126
        %1260 = vmatprep.subr.mxu0 0.0
        %1261 = vmatpush1.msra.mxu0 0.0
        %1262 = vmatprep.subr.mxu0 0.0
        %1263 = vmatpush1.msra.mxu0 0.0
        %1264 = vmatprep.subr.mxu0 0.0
        %1265 = vmatpush1.msra.mxu0 0.0
        %1266 = vmatprep.subr.mxu0 0.0
        %1267 = vmatpush1.msra.mxu0 0.0
        %1268 = vmatprep.subr.mxu0 0.0
        %1269 = vmatpush1.msra.mxu0 0.0
        %1270 = vmatprep.subr.mxu0 0.0
        %1271 = vmatpush1.msra.mxu0 0.0
        %1272 = vmatprep.subr.mxu0 0.0
        %1273 = vmatpush1.msra.mxu0 0.0
        %1274 = vmatprep.subr.mxu0 0.0
        %1275 = vmatpush1.msra.mxu0 0.0
        %1276 = vmatprep.subr.mxu0 0.0
        %1277 = vmatpush1.msra.mxu0 0.0
        %1278 = vmatprep.subr.mxu0 0.0
        %1279 = vmatpush1.msra.mxu0 0.0
        %1280 = vmatprep.subr.mxu0 0.0
        %1281 = vmatpush1.msra.mxu0 0.0
        %1282 = vmatprep.subr.mxu0 0.0
        %1283 = vmatpush1.msra.mxu0 0.0
        %1284 = vmatprep.subr.mxu0 0.0
        %1285 = vmatpush1.msra.mxu0 0.0
        %1286 = vmatprep.subr.mxu0 0.0
        %1287 = vmatpush1.msra.mxu0 0.0
        %1288 = vmatprep.subr.mxu0 0.0
        %1289 = vmatpush1.msra.mxu0 0.0
        %1290 = vmatprep.subr.mxu0 0.0
        %1291 = vmatpush1.msra.mxu0 0.0
        %1292 = vmatprep.subr.mxu0 0.0
        %1293 = vmatpush1.msra.mxu0 0.0
        %1294 = vmatprep.subr.mxu0 0.0
        %1295 = vmatpush1.msra.mxu0 0.0
        %1296 = vmatprep.subr.mxu0 0.0
        %1297 = vmatpush1.msra.mxu0 0.0
        %1298 = vmatprep.subr.mxu0 0.0
        %1299 = vmatpush1.msra.mxu0 0.0
        %1300 = vmatprep.subr.mxu0 0.0
        %1301 = vmatpush1.msra.mxu0 0.0
        %1302 = vmatprep.subr.mxu0 0.0
        %1303 = vmatpush1.msra.mxu0 0.0
        %1304 = vmatprep.subr.mxu0 0.0
        %1305 = vmatpush1.msra.mxu0 0.0
        %1306 = vmatprep.subr.mxu0 0.0
        %1307 = vmatpush1.msra.mxu0 0.0
        %1308 = vmatprep.subr.mxu0 0.0
        %1309 = vmatpush1.msra.mxu0 0.0
        %1310 = vmatprep.subr.mxu0 0.0
        %1311 = vmatpush1.msra.mxu0 0.0
        %1312 = vmatprep.subr.mxu0 0.0
        %1313 = vmatpush1.msra.mxu0 0.0
        %1314 = vmatprep.subr.mxu0 0.0
        %1315 = vmatpush1.msra.mxu0 0.0
        %1316 = vmatprep.mubr.f32.mxu0 0.0
        %1317 = vmatmul.mubr.f32.gmra.mrb[0].mxu0 %v1241
        %v1318 = vpop.f32.mrb[0].mxu0
        %v1319 = vadd.f32 0.0, %v1318
        %v1320 = vpop.f32.mrb[0].mxu0
        %1321 = vmatprep.mubr.f32.mxu0 0.0
        %1322 = vmatmul.mubr.f32.gmra.mrb[0].mxu0 %v1244
        %v1323 = vpop.f32.mrb[0].mxu0
        %v1324 = vadd.f32 0.0, %v1323
        %v1325 = vpop.f32.mrb[0].mxu0
        %1326 = vmatprep.mubr.f32.mxu0 0.0
        %1327 = vmatmul.mubr.f32.gmra.mrb[0].mxu0 %v1247
        %v1328 = vpop.f32.mrb[0].mxu0
        %v1329 = vadd.f32 0.0, %v1328
        %v1330 = vpop.f32.mrb[0].mxu0
        %1331 = vmatprep.mubr.f32.mxu0 0.0
        %1332 = vmatmul.mubr.f32.gmra.mrb[0].mxu0 %v1250
        %v1333 = vpop.f32.mrb[0].mxu0
        %v1334 = vadd.f32 0.0, %v1333
        %v1335 = vpop.f32.mrb[0].mxu0
        %1336 = vdwg.mxu0
        %v1337 = vadd.f32 %v1319, %v1116
        %v1338 = vadd.f32 %v1324, %v1116
        %v1339 = vadd.f32 %v1329, %v1116
        %v1340 = vadd.f32 %v1334, %v1116
        %1341 = vst.msk [vmem:[%s300] sm:$0xff] %vm321, %v1337
        %1342 = vst.msk [vmem:[%s300 + $0x8] sm:$0xff] %vm321, %v1338
        %1343 = vst.msk [vmem:[%s300 + $0x10] sm:$0xff] %vm321, %v1339
        %1344 = vst.msk [vmem:[%s300 + $0x18] sm:$0xff] %vm321, %v1340
        %s1345 = sand.u32 %s142, 1
        %s1346 = scalar_lea.sflag [#allocation4], %s1345
        %s1347 = sand.u32 %s142, 1
        %s1348 = smul.addr %s1347, 32
        %s1349 = scalar_lea.vmem [#allocation11], %s1348
        // Predicated region
        $region61: #{tpu_custom_call.1} parent=39 // pred_check
          %p1350 = pneg %p152
        $region62: #{tpu_custom_call.1} parent=39 // pred_check_branch
          %1352 = sbr.rel (%p1350) target = $region64
        $region63: #{tpu_custom_call.1} parent=39 // pred_region
          %s1354 = ssub.s32 512, 512
          %1355 = vsyncadd %s1346, %s1354
          %s1356 = smul.addr %s24, 4
          %s1357 = smul.addr %s1356, 128
          %s1358 = scalar_lea.hbm %s5, %s1357
          %s1359 = sshll.u32 %s1349, 4
          %s1360 = int_to_ptr.vmem [resolvable:$true] %s1359
          %1365 = dma.vmem_to_hbm [thread:$0]  %s1360, 512, %s1358, %s1346, 128, 128, 8
        $region64: #{tpu_custom_call.1} parent=39 // pred_fallthru
          _
      $region40: #{tpu_custom_call.1} parent=5 // pred_fallthru
        _
      %p1366 = scmp.le.s32.totalorder 2, %s19
      // Predicated region
      $region65: #{tpu_custom_call.1} parent=5 // pred_check
        %p1367 = pneg %p1366
      $region66: #{tpu_custom_call.1} parent=5 // pred_check_branch
        %1369 = sbr.rel (%p1367) target = $region68
      $region67: #{tpu_custom_call.1} parent=5 // pred_region
        %s1370 = ssub.s32 %s19, 2
        // Predicated region
        $region69: #{tpu_custom_call.1} parent=67 // pred_check
          %p1371 = pneg %p158
        $region70: #{tpu_custom_call.1} parent=67 // pred_check_branch
          %1373 = sbr.rel (%p1371) target = $region72
        $region71: #{tpu_custom_call.1} parent=67 // pred_region
          %s1374 = sand.u32 %s143, 1
          %s1375 = scalar_lea.sflag [#allocation4], %s1374
          %s1376 = sand.u32 %s143, 1
          %s1377 = smul.addr %s1376, 32
          %s1378 = scalar_lea.vmem [#allocation11], %s1377
          %1379 = dma.done %s1375, 512
        $region72: #{tpu_custom_call.1} parent=67 // pred_fallthru
          _
      $region68: #{tpu_custom_call.1} parent=5 // pred_fallthru
        _
    $region6: #{tpu_custom_call.1} parent=1 // loop_footer
      %s23 = sadd.s32 1, %s19
    $region7: #{tpu_custom_call.1} parent=1 // loop_footer_branch
      %18 = sbr.rel target = $region3
    $region8: #{tpu_custom_call.1} parent=1 // loop_exit
      _
    %1380 = vsyncpa [#allocation3], 1
    %s1381 = scalar_lea.sflag [#allocation3], 1
    %1382 = vsyncpa %s1381, 1
    %1383 = vsyncpa [#allocation6], 1
    %1384 = vsyncpa [#allocation9], 1
    %1385 = vsyncpa [#allocation4], 1
    %s1386 = scalar_lea.sflag [#allocation4], 1
    %1387 = vsyncpa %s1386, 1

</llo_original>
